<compile_context>
chip_gen: v7x
topology: tpu7x:2x2x1
jax: 0.10.0
libtpu: 0.0.40
codegen_flags: <defaults>
</compile_context>

<pallas_src>
import functools

import jax
import jax.numpy as jnp
from jax.experimental import pallas as pl
from jax.experimental.pallas import tpu as pltpu


# -----------------------------------------------------------------------------
# Fused backbone (3x3 conv + ReLU) + head (GeM pool + L2 norm) kernel
# -----------------------------------------------------------------------------
def _fused_conv_gem_kernel(x_ref, w_ref, b_ref, m_ref, o_ref, pad_ref, stag_ref,
                           *, H, W, TH, Bt, p, gem_eps, l2_eps):
    """One grid step == Bt batch elements.

    x_ref   : (Bt, C_in, H*W)      raw NCHW images, spatial flattened (no pad).
    w_ref   : (C_out, 9*C_in)      conv weight with the 9 taps folded into K.
    b_ref   : (C_out, 1)           conv bias.
    m_ref   : (1, TH*(W+2))        f32 column-validity mask (1.0 where col < W).
    o_ref   : (1, Bt, C_out)       L2-normalized GeM descriptors.
    pad_ref : (C_in, (H+3)*(W+2))  VMEM scratch: zero-padded, lane-flat image.
    stag_ref: (9*C_in, TH*(W+2))   VMEM scratch: partial-im2col staging tile.
    """
    Wp = W + 2
    C_in = pad_ref.shape[0]
    C_out = o_ref.shape[2]

    # Tiny resident operands, loaded once per grid step.
    w2 = w_ref[...]                                  # (C_out, 9*C_in)
    bias = b_ref[...]                                # (C_out, 1)

    # Integer-p fast path decided at trace time (p is a static constant).
    p_int = int(round(p))
    int_p = abs(p - p_int) < 1e-9 and 1 <= p_int <= 4
    inv_hw = 1.0 / float(H * W)
    num_chunks = -(-H // TH)                         # ceil, static

    # Zero the padded scratch once per step; the halo stays zero and the
    # interior is overwritten per image below (only ~KBs of stores).
    pad_ref[...] = jnp.zeros_like(pad_ref)

    for bi in range(Bt):                             # static, small
        # ---- build the zero-padded, lane-flattened image in VMEM -----------
        # (the raw input is read from HBM exactly once; no padded HBM copy)
        for h in range(H):
            dst = (h + 1) * Wp + 1                   # static offset
            pad_ref[:, dst:dst + W] = x_ref[bi, :, h * W:(h + 1) * W]

        gem_sum = None                               # (C_out, 1) running sum of x^p

        for c in range(num_chunks):                  # Lc bounded to ~2K lanes
            r0 = c * TH
            rows = min(TH, H - r0)
            Lc = rows * Wp

            # ---- partial im2col in VMEM: 9 shifted lane slices stacked -----
            for ky in range(3):
                for kx in range(3):
                    t = ky * 3 + kx
                    s = (r0 + ky) * Wp + kx          # fully static offset
                    stag_ref[t * C_in:(t + 1) * C_in, :Lc] = pad_ref[:, s:s + Lc]

            # ---- ONE folded MXU contraction: (C_out,36) @ (36,Lc) ----------
            z = jnp.dot(w2, stag_ref[:, :Lc],
                        preferred_element_type=jnp.float32,
                        precision=jax.lax.Precision.HIGHEST)
            z = jnp.maximum(z + bias, 0.0)           # conv bias + ReLU
            xg = jnp.maximum(z, gem_eps)             # GeM clamp

            # ---- GeM: x ** p ----------------------------------------------
            if int_p:
                xp = xg
                for _ in range(p_int - 1):           # p=3 -> x*x*x on the VPU
                    xp = xp * xg
            else:
                xp = jnp.exp(p * jnp.log(xg))        # general p (EUP)

            # Drop the 2 width-pad columns per row, reduce over the lane axis.
            xp = xp * m_ref[:, :Lc]
            part = jnp.sum(xp, axis=1, keepdims=True)            # (C_out, 1)
            gem_sum = part if gem_sum is None else gem_sum + part

        # ---- finalize: mean, ^(1/p), L2 normalize (C_out elements) ---------
        mean = gem_sum * inv_hw
        if int_p and p_int == 1:
            gem = mean
        else:
            gem = jnp.exp(jnp.log(mean) * (1.0 / p))             # mean ** (1/p)
        ssq = jnp.sum(gem * gem, axis=0, keepdims=True)          # (1, 1)
        norm = jnp.maximum(jnp.sqrt(ssq), l2_eps)
        desc = (gem / norm).astype(o_ref.dtype)                  # (C_out, 1)
        o_ref[0:1, bi:bi + 1, :] = desc.reshape(1, 1, C_out)     # lane-dense row


def _pick_images_per_step(B, per_image_bytes, target_bytes=256 * 1024):
    """Batch tiny images per grid step (amortize ~0.35us/step overhead) while
    always keeping >= 2 grid steps so both v7x TensorCores stay busy."""
    best = 1
    for d in range(1, B + 1):
        if B % d != 0:
            continue
        if B >= 2 and B // d < 2:
            continue
        if d * per_image_bytes <= target_bytes:
            best = d
    return best


def fused_image_descriptor(x_nchw, conv_w, conv_b, gem_p,
                           *, gem_eps=1e-6, l2_eps=1e-12):
    """Fused conv3x3+ReLU backbone and GeM+L2 head.

    x_nchw: (B, C_in, H, W) float32 (PyTorch NCHW layout)
    conv_w: (C_out, C_in, 3, 3) float32 (PyTorch OIHW layout)
    conv_b: (C_out,) float32
    gem_p : python float, GeM power (static inference constant)
    returns (B, C_out) float32 L2-normalized descriptors
    """
    B, C_in, H, W = x_nchw.shape
    C_out = conv_w.shape[0]

    # gem_p must be a static Python number (int-p fast path + folded 1/(H*W));
    # fail loudly instead of silently freezing a traced value.
    if isinstance(gem_p, jax.core.Tracer):
        raise TypeError("gem_p must be a static Python number at inference time")
    p = float(gem_p)

    Wp = W + 2
    Lpad = (H + 3) * Wp

    per_image_bytes = C_in * H * W * 4
    Bt = _pick_images_per_step(B, per_image_bytes)
    G = B // Bt

    # Spatial chunking: keep the conv tile's lane extent ~2K regardless of H.
    TH = max(1, min(H, 2048 // Wp))
    Lc_max = TH * Wp
    # TODO(synk): for very large images, move the chunk loop into a second grid
    # axis with halo row-bands (pl.Element) so the input block is a band rather
    # than the whole image and the static unroll count stays O(1).

    # Free metadata reshape (contiguous) -- no padded HBM copy is materialized.
    x_flat = x_nchw.reshape(B, C_in, H * W)

    # PyTorch OIHW -> folded (C_out, 9*C_in), K index = (ky*3+kx)*C_in + c.
    w2d = jnp.transpose(conv_w, (0, 2, 3, 1)).reshape(C_out, 9 * C_in)
    b_col = conv_b.reshape(C_out, 1)

    # Column-validity mask for one chunk (excludes the 2 pad lanes per row from
    # the GeM mean). Kept as a tiny resident input: trivially cheap and avoids
    # relying on vector integer-remainder lowering inside the kernel.
    col = jnp.arange(Lc_max, dtype=jnp.int32) % Wp
    mask = (col < W).astype(jnp.float32).reshape(1, Lc_max)

    kernel = functools.partial(
        _fused_conv_gem_kernel, H=H, W=W, TH=TH, Bt=Bt, p=p,
        gem_eps=gem_eps, l2_eps=l2_eps)

    # Explicit scoped-VMEM budget derived from the actual footprint (defaults
    # are 16 MiB on v5e / 32 MiB on v6e+v7x; v7x physical is only 64 MiB).
    need_elems = (2 * (Bt * C_in * H * W + Bt * C_out)   # dbl-buffered in/out
                  + C_in * Lpad + 9 * C_in * Lc_max      # pad + staging scratch
                  + 4 * C_out * Lc_max                   # conv/GeM intermediates
                  + C_out * 9 * C_in + C_out + Lc_max)   # resident operands
    vmem_limit = int(min(64 * 2**20, max(16 * 2**20, 4 * need_elems * 4)))

    out = pl.pallas_call(
        kernel,
        out_shape=jax.ShapeDtypeStruct((G, Bt, C_out), jnp.float32),
        grid=(G,),
        in_specs=[
            pl.BlockSpec((Bt, C_in, H * W), lambda i: (i, 0, 0)),   # images
            pl.BlockSpec((C_out, 9 * C_in), lambda i: (0, 0)),      # resident
            pl.BlockSpec((C_out, 1), lambda i: (0, 0)),             # resident
            pl.BlockSpec((1, Lc_max), lambda i: (0, 0)),            # resident
        ],
        out_specs=pl.BlockSpec((1, Bt, C_out), lambda i: (i, 0, 0)),
        scratch_shapes=[
            pltpu.VMEM((C_in, Lpad), jnp.float32),        # padded image (halo)
            pltpu.VMEM((9 * C_in, Lc_max), jnp.float32),  # im2col staging tile
        ],
        compiler_params=pltpu.CompilerParams(
            dimension_semantics=("parallel",),
            vmem_limit_bytes=vmem_limit),
    )(x_flat, w2d, b_col, mask)

    return out.reshape(B, C_out)


# -----------------------------------------------------------------------------
# ImageModel.forward equivalent (forward_type='fp32', fusion=None)
# -----------------------------------------------------------------------------
def image_model_forward(batch, params):
    img_descriptors = {}
    for key, value in batch.items():
        if key.startswith("images_"):
            # TODO(synk): onnx_fp32 / trt_fp32 / trt_int8 forward types are
            # CUDA ORT/TensorRT runtime paths with no Pallas equivalent.
            img_descriptors[key] = fused_image_descriptor(
                value, params["conv_w"], params["conv_b"], params["gem_p"])
    if len(img_descriptors) > 1:
        # TODO(synk): fusion module is None for this synthetic instantiation.
        raise ValueError(
            "Fusion module is not defined but multiple images are provided")
    descriptor = list(img_descriptors.values())[0]
    return {"final_descriptor": descriptor}


# -----------------------------------------------------------------------------
# Pure-JAX reference (for correctness) + demo
# -----------------------------------------------------------------------------
def _reference_forward(x, conv_w, conv_b, p, gem_eps=1e-6, l2_eps=1e-12):
    feat = jax.lax.conv_general_dilated(
        x, conv_w, window_strides=(1, 1), padding="SAME",
        dimension_numbers=("NCHW", "OIHW", "NCHW"),
        precision=jax.lax.Precision.HIGHEST)
    feat = jnp.maximum(feat + conv_b[None, :, None, None], 0.0)
    clamped = jnp.maximum(feat, gem_eps)
    pooled = jnp.mean(clamped ** p, axis=(2, 3)) ** (1.0 / p)
    norm = jnp.maximum(jnp.linalg.norm(pooled, axis=-1, keepdims=True), l2_eps)
    return pooled / norm


if __name__ == "__main__":
    B, C_in, H, W = 2, 4, 16, 16
    C_out = 32

    key = jax.random.PRNGKey(0)
    k_x, k_w, k_b = jax.random.split(key, 3)
    x = jax.random.normal(k_x, (B, C_in, H, W), dtype=jnp.float32)   # NCHW
    params = {
        # PyTorch-native layouts: OIHW conv weight, (C_out,) bias.
        "conv_w": jax.random.normal(k_w, (C_out, C_in, 3, 3), jnp.float32) * 0.1,
        "conv_b": jax.random.normal(k_b, (C_out,), jnp.float32) * 0.01,
        "gem_p": 3.0,   # GeM power (static at inference time)
    }

    batch = {"images_front": x}
    out = image_model_forward(batch, params)
    desc = jax.block_until_ready(out["final_descriptor"])

    assert desc.shape == (B, C_out), desc.shape
    assert bool(jnp.all(jnp.isfinite(desc)))
    norms = jnp.linalg.norm(desc, axis=-1)
    assert bool(jnp.all(jnp.abs(norms - 1.0) < 1e-4)), norms

    ref = _reference_forward(x, params["conv_w"], params["conv_b"], params["gem_p"])
    max_err = float(jnp.max(jnp.abs(desc - ref)))
    assert max_err < 1e-3, max_err

    print("KERNEL_OK")
</pallas_src>

<mosaic_0001>
module attributes {stable_mosaic.version = 11 : i64} {
  func.func @_fused_conv_gem_kernel(%arg0: i32, %arg1: memref<1x4x256xf32, #tpu.memory_space<vmem>>, %arg2: memref<32x36xf32, #tpu.memory_space<vmem>>, %arg3: memref<32x1xf32, #tpu.memory_space<vmem>>, %arg4: memref<1x288xf32, #tpu.memory_space<vmem>>, %arg5: memref<1x1x32xf32, #tpu.memory_space<vmem>>, %arg6: memref<4x342xf32, #tpu.memory_space<vmem>>, %arg7: memref<36x288xf32, #tpu.memory_space<vmem>>) attributes {dimension_semantics = [#tpu.dimension_semantics<parallel>], iteration_bounds = array<i64: 2>, scalar_prefetch = 0 : i64, scratch_operands = 2 : i64, tpu.core_type = #tpu.core_type<tc>, window_params = [{transform_indices = @transform_0, window_bounds = array<i64: 1, 4, 256>}, {pipeline_mode = #tpu.pipeline_mode<synchronous>, transform_indices = @transform_1, window_bounds = array<i64: 32, 36>}, {pipeline_mode = #tpu.pipeline_mode<synchronous>, transform_indices = @transform_2, window_bounds = array<i64: 32, 1>}, {pipeline_mode = #tpu.pipeline_mode<synchronous>, transform_indices = @transform_3, window_bounds = array<i64: 1, 288>}, {transform_indices = @transform_4, window_bounds = array<i64: 1, 1, 32>}]} {
    %c0 = arith.constant 0 : index
    %c0_0 = arith.constant 0 : index
    %0 = vector.load %arg2[%c0, %c0_0] : memref<32x36xf32, #tpu.memory_space<vmem>>, vector<32x36xf32>
    %c0_1 = arith.constant 0 : index
    %c0_2 = arith.constant 0 : index
    %1 = vector.load %arg3[%c0_1, %c0_2] : memref<32x1xf32, #tpu.memory_space<vmem>>, vector<32x1xf32>
    %cst = arith.constant 0.000000e+00 : f32
    %2 = vector.broadcast %cst : f32 to vector<4x342xf32>
    %c0_3 = arith.constant 0 : index
    %c0_4 = arith.constant 0 : index
    %3 = vector.load %arg6[%c0_3, %c0_4] : memref<4x342xf32, #tpu.memory_space<vmem>>, vector<4x342xf32>
    tpu.vector_store %arg6[%c0_3, %c0_4], %2 {strides = array<i32>} : memref<4x342xf32, #tpu.memory_space<vmem>>, vector<4x342xf32>,
    %c0_5 = arith.constant 0 : index
    %c0_6 = arith.constant 0 : index
    %c0_7 = arith.constant 0 : index
    %4 = vector.load %arg1[%c0_5, %c0_6, %c0_7] : memref<1x4x256xf32, #tpu.memory_space<vmem>>, vector<1x4x16xf32>
    %5 = vector.shape_cast %4 : vector<1x4x16xf32> to vector<4x16xf32>
    %c0_8 = arith.constant 0 : index
    %c19 = arith.constant 19 : index
    %6 = vector.load %arg6[%c0_8, %c19] : memref<4x342xf32, #tpu.memory_space<vmem>>, vector<4x16xf32>
    tpu.vector_store %arg6[%c0_8, %c19], %5 {strides = array<i32>} : memref<4x342xf32, #tpu.memory_space<vmem>>, vector<4x16xf32>,
    %c0_9 = arith.constant 0 : index
    %c0_10 = arith.constant 0 : index
    %c16 = arith.constant 16 : index
    %7 = vector.load %arg1[%c0_9, %c0_10, %c16] : memref<1x4x256xf32, #tpu.memory_space<vmem>>, vector<1x4x16xf32>
    %8 = vector.shape_cast %7 : vector<1x4x16xf32> to vector<4x16xf32>
    %c0_11 = arith.constant 0 : index
    %c37 = arith.constant 37 : index
    %9 = vector.load %arg6[%c0_11, %c37] : memref<4x342xf32, #tpu.memory_space<vmem>>, vector<4x16xf32>
    tpu.vector_store %arg6[%c0_11, %c37], %8 {strides = array<i32>} : memref<4x342xf32, #tpu.memory_space<vmem>>, vector<4x16xf32>,
    %c0_12 = arith.constant 0 : index
    %c0_13 = arith.constant 0 : index
    %c32 = arith.constant 32 : index
    %10 = vector.load %arg1[%c0_12, %c0_13, %c32] : memref<1x4x256xf32, #tpu.memory_space<vmem>>, vector<1x4x16xf32>
    %11 = vector.shape_cast %10 : vector<1x4x16xf32> to vector<4x16xf32>
    %c0_14 = arith.constant 0 : index
    %c55 = arith.constant 55 : index
    %12 = vector.load %arg6[%c0_14, %c55] : memref<4x342xf32, #tpu.memory_space<vmem>>, vector<4x16xf32>
    tpu.vector_store %arg6[%c0_14, %c55], %11 {strides = array<i32>} : memref<4x342xf32, #tpu.memory_space<vmem>>, vector<4x16xf32>,
    %c0_15 = arith.constant 0 : index
    %c0_16 = arith.constant 0 : index
    %c48 = arith.constant 48 : index
    %13 = vector.load %arg1[%c0_15, %c0_16, %c48] : memref<1x4x256xf32, #tpu.memory_space<vmem>>, vector<1x4x16xf32>
    %14 = vector.shape_cast %13 : vector<1x4x16xf32> to vector<4x16xf32>
    %c0_17 = arith.constant 0 : index
    %c73 = arith.constant 73 : index
    %15 = vector.load %arg6[%c0_17, %c73] : memref<4x342xf32, #tpu.memory_space<vmem>>, vector<4x16xf32>
    tpu.vector_store %arg6[%c0_17, %c73], %14 {strides = array<i32>} : memref<4x342xf32, #tpu.memory_space<vmem>>, vector<4x16xf32>,
    %c0_18 = arith.constant 0 : index
    %c0_19 = arith.constant 0 : index
    %c64 = arith.constant 64 : index
    %16 = vector.load %arg1[%c0_18, %c0_19, %c64] : memref<1x4x256xf32, #tpu.memory_space<vmem>>, vector<1x4x16xf32>
    %17 = vector.shape_cast %16 : vector<1x4x16xf32> to vector<4x16xf32>
    %c0_20 = arith.constant 0 : index
    %c91 = arith.constant 91 : index
    %18 = vector.load %arg6[%c0_20, %c91] : memref<4x342xf32, #tpu.memory_space<vmem>>, vector<4x16xf32>
    tpu.vector_store %arg6[%c0_20, %c91], %17 {strides = array<i32>} : memref<4x342xf32, #tpu.memory_space<vmem>>, vector<4x16xf32>,
    %c0_21 = arith.constant 0 : index
    %c0_22 = arith.constant 0 : index
    %c80 = arith.constant 80 : index
    %19 = vector.load %arg1[%c0_21, %c0_22, %c80] : memref<1x4x256xf32, #tpu.memory_space<vmem>>, vector<1x4x16xf32>
    %20 = vector.shape_cast %19 : vector<1x4x16xf32> to vector<4x16xf32>
    %c0_23 = arith.constant 0 : index
    %c109 = arith.constant 109 : index
    %21 = vector.load %arg6[%c0_23, %c109] : memref<4x342xf32, #tpu.memory_space<vmem>>, vector<4x16xf32>
    tpu.vector_store %arg6[%c0_23, %c109], %20 {strides = array<i32>} : memref<4x342xf32, #tpu.memory_space<vmem>>, vector<4x16xf32>,
    %c0_24 = arith.constant 0 : index
    %c0_25 = arith.constant 0 : index
    %c96 = arith.constant 96 : index
    %22 = vector.load %arg1[%c0_24, %c0_25, %c96] : memref<1x4x256xf32, #tpu.memory_space<vmem>>, vector<1x4x16xf32>
    %23 = vector.shape_cast %22 : vector<1x4x16xf32> to vector<4x16xf32>
    %c0_26 = arith.constant 0 : index
    %c127 = arith.constant 127 : index
    %24 = vector.load %arg6[%c0_26, %c127] : memref<4x342xf32, #tpu.memory_space<vmem>>, vector<4x16xf32>
    tpu.vector_store %arg6[%c0_26, %c127], %23 {strides = array<i32>} : memref<4x342xf32, #tpu.memory_space<vmem>>, vector<4x16xf32>,
    %c0_27 = arith.constant 0 : index
    %c0_28 = arith.constant 0 : index
    %c112 = arith.constant 112 : index
    %25 = vector.load %arg1[%c0_27, %c0_28, %c112] : memref<1x4x256xf32, #tpu.memory_space<vmem>>, vector<1x4x16xf32>
    %26 = vector.shape_cast %25 : vector<1x4x16xf32> to vector<4x16xf32>
    %c0_29 = arith.constant 0 : index
    %c145 = arith.constant 145 : index
    %27 = vector.load %arg6[%c0_29, %c145] : memref<4x342xf32, #tpu.memory_space<vmem>>, vector<4x16xf32>
    tpu.vector_store %arg6[%c0_29, %c145], %26 {strides = array<i32>} : memref<4x342xf32, #tpu.memory_space<vmem>>, vector<4x16xf32>,
    %c0_30 = arith.constant 0 : index
    %c0_31 = arith.constant 0 : index
    %c128 = arith.constant 128 : index
    %28 = vector.load %arg1[%c0_30, %c0_31, %c128] : memref<1x4x256xf32, #tpu.memory_space<vmem>>, vector<1x4x16xf32>
    %29 = vector.shape_cast %28 : vector<1x4x16xf32> to vector<4x16xf32>
    %c0_32 = arith.constant 0 : index
    %c163 = arith.constant 163 : index
    %30 = vector.load %arg6[%c0_32, %c163] : memref<4x342xf32, #tpu.memory_space<vmem>>, vector<4x16xf32>
    tpu.vector_store %arg6[%c0_32, %c163], %29 {strides = array<i32>} : memref<4x342xf32, #tpu.memory_space<vmem>>, vector<4x16xf32>,
    %c0_33 = arith.constant 0 : index
    %c0_34 = arith.constant 0 : index
    %c144 = arith.constant 144 : index
    %31 = vector.load %arg1[%c0_33, %c0_34, %c144] : memref<1x4x256xf32, #tpu.memory_space<vmem>>, vector<1x4x16xf32>
    %32 = vector.shape_cast %31 : vector<1x4x16xf32> to vector<4x16xf32>
    %c0_35 = arith.constant 0 : index
    %c181 = arith.constant 181 : index
    %33 = vector.load %arg6[%c0_35, %c181] : memref<4x342xf32, #tpu.memory_space<vmem>>, vector<4x16xf32>
    tpu.vector_store %arg6[%c0_35, %c181], %32 {strides = array<i32>} : memref<4x342xf32, #tpu.memory_space<vmem>>, vector<4x16xf32>,
    %c0_36 = arith.constant 0 : index
    %c0_37 = arith.constant 0 : index
    %c160 = arith.constant 160 : index
    %34 = vector.load %arg1[%c0_36, %c0_37, %c160] : memref<1x4x256xf32, #tpu.memory_space<vmem>>, vector<1x4x16xf32>
    %35 = vector.shape_cast %34 : vector<1x4x16xf32> to vector<4x16xf32>
    %c0_38 = arith.constant 0 : index
    %c199 = arith.constant 199 : index
    %36 = vector.load %arg6[%c0_38, %c199] : memref<4x342xf32, #tpu.memory_space<vmem>>, vector<4x16xf32>
    tpu.vector_store %arg6[%c0_38, %c199], %35 {strides = array<i32>} : memref<4x342xf32, #tpu.memory_space<vmem>>, vector<4x16xf32>,
    %c0_39 = arith.constant 0 : index
    %c0_40 = arith.constant 0 : index
    %c176 = arith.constant 176 : index
    %37 = vector.load %arg1[%c0_39, %c0_40, %c176] : memref<1x4x256xf32, #tpu.memory_space<vmem>>, vector<1x4x16xf32>
    %38 = vector.shape_cast %37 : vector<1x4x16xf32> to vector<4x16xf32>
    %c0_41 = arith.constant 0 : index
    %c217 = arith.constant 217 : index
    %39 = vector.load %arg6[%c0_41, %c217] : memref<4x342xf32, #tpu.memory_space<vmem>>, vector<4x16xf32>
    tpu.vector_store %arg6[%c0_41, %c217], %38 {strides = array<i32>} : memref<4x342xf32, #tpu.memory_space<vmem>>, vector<4x16xf32>,
    %c0_42 = arith.constant 0 : index
    %c0_43 = arith.constant 0 : index
    %c192 = arith.constant 192 : index
    %40 = vector.load %arg1[%c0_42, %c0_43, %c192] : memref<1x4x256xf32, #tpu.memory_space<vmem>>, vector<1x4x16xf32>
    %41 = vector.shape_cast %40 : vector<1x4x16xf32> to vector<4x16xf32>
    %c0_44 = arith.constant 0 : index
    %c235 = arith.constant 235 : index
    %42 = vector.load %arg6[%c0_44, %c235] : memref<4x342xf32, #tpu.memory_space<vmem>>, vector<4x16xf32>
    tpu.vector_store %arg6[%c0_44, %c235], %41 {strides = array<i32>} : memref<4x342xf32, #tpu.memory_space<vmem>>, vector<4x16xf32>,
    %c0_45 = arith.constant 0 : index
    %c0_46 = arith.constant 0 : index
    %c208 = arith.constant 208 : index
    %43 = vector.load %arg1[%c0_45, %c0_46, %c208] : memref<1x4x256xf32, #tpu.memory_space<vmem>>, vector<1x4x16xf32>
    %44 = vector.shape_cast %43 : vector<1x4x16xf32> to vector<4x16xf32>
    %c0_47 = arith.constant 0 : index
    %c253 = arith.constant 253 : index
    %45 = vector.load %arg6[%c0_47, %c253] : memref<4x342xf32, #tpu.memory_space<vmem>>, vector<4x16xf32>
    tpu.vector_store %arg6[%c0_47, %c253], %44 {strides = array<i32>} : memref<4x342xf32, #tpu.memory_space<vmem>>, vector<4x16xf32>,
    %c0_48 = arith.constant 0 : index
    %c0_49 = arith.constant 0 : index
    %c224 = arith.constant 224 : index
    %46 = vector.load %arg1[%c0_48, %c0_49, %c224] : memref<1x4x256xf32, #tpu.memory_space<vmem>>, vector<1x4x16xf32>
    %47 = vector.shape_cast %46 : vector<1x4x16xf32> to vector<4x16xf32>
    %c0_50 = arith.constant 0 : index
    %c271 = arith.constant 271 : index
    %48 = vector.load %arg6[%c0_50, %c271] : memref<4x342xf32, #tpu.memory_space<vmem>>, vector<4x16xf32>
    tpu.vector_store %arg6[%c0_50, %c271], %47 {strides = array<i32>} : memref<4x342xf32, #tpu.memory_space<vmem>>, vector<4x16xf32>,
    %c0_51 = arith.constant 0 : index
    %c0_52 = arith.constant 0 : index
    %c240 = arith.constant 240 : index
    %49 = vector.load %arg1[%c0_51, %c0_52, %c240] : memref<1x4x256xf32, #tpu.memory_space<vmem>>, vector<1x4x16xf32>
    %50 = vector.shape_cast %49 : vector<1x4x16xf32> to vector<4x16xf32>
    %c0_53 = arith.constant 0 : index
    %c289 = arith.constant 289 : index
    %51 = vector.load %arg6[%c0_53, %c289] : memref<4x342xf32, #tpu.memory_space<vmem>>, vector<4x16xf32>
    tpu.vector_store %arg6[%c0_53, %c289], %50 {strides = array<i32>} : memref<4x342xf32, #tpu.memory_space<vmem>>, vector<4x16xf32>,
    %c0_54 = arith.constant 0 : index
    %c0_55 = arith.constant 0 : index
    %52 = vector.load %arg6[%c0_54, %c0_55] : memref<4x342xf32, #tpu.memory_space<vmem>>, vector<4x288xf32>
    %c0_56 = arith.constant 0 : index
    %c0_57 = arith.constant 0 : index
    %53 = vector.load %arg7[%c0_56, %c0_57] : memref<36x288xf32, #tpu.memory_space<vmem>>, vector<4x288xf32>
    tpu.vector_store %arg7[%c0_56, %c0_57], %52 {strides = array<i32>} : memref<36x288xf32, #tpu.memory_space<vmem>>, vector<4x288xf32>,
    %c0_58 = arith.constant 0 : index
    %c1 = arith.constant 1 : index
    %54 = vector.load %arg6[%c0_58, %c1] : memref<4x342xf32, #tpu.memory_space<vmem>>, vector<4x288xf32>
    %c4 = arith.constant 4 : index
    %c0_59 = arith.constant 0 : index
    %55 = vector.load %arg7[%c4, %c0_59] : memref<36x288xf32, #tpu.memory_space<vmem>>, vector<4x288xf32>
    tpu.vector_store %arg7[%c4, %c0_59], %54 {strides = array<i32>} : memref<36x288xf32, #tpu.memory_space<vmem>>, vector<4x288xf32>,
    %c0_60 = arith.constant 0 : index
    %c2 = arith.constant 2 : index
    %56 = vector.load %arg6[%c0_60, %c2] : memref<4x342xf32, #tpu.memory_space<vmem>>, vector<4x288xf32>
    %c8 = arith.constant 8 : index
    %c0_61 = arith.constant 0 : index
    %57 = vector.load %arg7[%c8, %c0_61] : memref<36x288xf32, #tpu.memory_space<vmem>>, vector<4x288xf32>
    tpu.vector_store %arg7[%c8, %c0_61], %56 {strides = array<i32>} : memref<36x288xf32, #tpu.memory_space<vmem>>, vector<4x288xf32>,
    %c0_62 = arith.constant 0 : index
    %c18 = arith.constant 18 : index
    %58 = vector.load %arg6[%c0_62, %c18] : memref<4x342xf32, #tpu.memory_space<vmem>>, vector<4x288xf32>
    %c12 = arith.constant 12 : index
    %c0_63 = arith.constant 0 : index
    %59 = vector.load %arg7[%c12, %c0_63] : memref<36x288xf32, #tpu.memory_space<vmem>>, vector<4x288xf32>
    tpu.vector_store %arg7[%c12, %c0_63], %58 {strides = array<i32>} : memref<36x288xf32, #tpu.memory_space<vmem>>, vector<4x288xf32>,
    %c0_64 = arith.constant 0 : index
    %c19_65 = arith.constant 19 : index
    %60 = vector.load %arg6[%c0_64, %c19_65] : memref<4x342xf32, #tpu.memory_space<vmem>>, vector<4x288xf32>
    %c16_66 = arith.constant 16 : index
    %c0_67 = arith.constant 0 : index
    %61 = vector.load %arg7[%c16_66, %c0_67] : memref<36x288xf32, #tpu.memory_space<vmem>>, vector<4x288xf32>
    tpu.vector_store %arg7[%c16_66, %c0_67], %60 {strides = array<i32>} : memref<36x288xf32, #tpu.memory_space<vmem>>, vector<4x288xf32>,
    %c0_68 = arith.constant 0 : index
    %c20 = arith.constant 20 : index
    %62 = vector.load %arg6[%c0_68, %c20] : memref<4x342xf32, #tpu.memory_space<vmem>>, vector<4x288xf32>
    %c20_69 = arith.constant 20 : index
    %c0_70 = arith.constant 0 : index
    %63 = vector.load %arg7[%c20_69, %c0_70] : memref<36x288xf32, #tpu.memory_space<vmem>>, vector<4x288xf32>
    tpu.vector_store %arg7[%c20_69, %c0_70], %62 {strides = array<i32>} : memref<36x288xf32, #tpu.memory_space<vmem>>, vector<4x288xf32>,
    %c0_71 = arith.constant 0 : index
    %c36 = arith.constant 36 : index
    %64 = vector.load %arg6[%c0_71, %c36] : memref<4x342xf32, #tpu.memory_space<vmem>>, vector<4x288xf32>
    %c24 = arith.constant 24 : index
    %c0_72 = arith.constant 0 : index
    %65 = vector.load %arg7[%c24, %c0_72] : memref<36x288xf32, #tpu.memory_space<vmem>>, vector<4x288xf32>
    tpu.vector_store %arg7[%c24, %c0_72], %64 {strides = array<i32>} : memref<36x288xf32, #tpu.memory_space<vmem>>, vector<4x288xf32>,
    %c0_73 = arith.constant 0 : index
    %c37_74 = arith.constant 37 : index
    %66 = vector.load %arg6[%c0_73, %c37_74] : memref<4x342xf32, #tpu.memory_space<vmem>>, vector<4x288xf32>
    %c28 = arith.constant 28 : index
    %c0_75 = arith.constant 0 : index
    %67 = vector.load %arg7[%c28, %c0_75] : memref<36x288xf32, #tpu.memory_space<vmem>>, vector<4x288xf32>
    tpu.vector_store %arg7[%c28, %c0_75], %66 {strides = array<i32>} : memref<36x288xf32, #tpu.memory_space<vmem>>, vector<4x288xf32>,
    %c0_76 = arith.constant 0 : index
    %c38 = arith.constant 38 : index
    %68 = vector.load %arg6[%c0_76, %c38] : memref<4x342xf32, #tpu.memory_space<vmem>>, vector<4x288xf32>
    %c32_77 = arith.constant 32 : index
    %c0_78 = arith.constant 0 : index
    %69 = vector.load %arg7[%c32_77, %c0_78] : memref<36x288xf32, #tpu.memory_space<vmem>>, vector<4x288xf32>
    tpu.vector_store %arg7[%c32_77, %c0_78], %68 {strides = array<i32>} : memref<36x288xf32, #tpu.memory_space<vmem>>, vector<4x288xf32>,
    %c0_79 = arith.constant 0 : index
    %c0_80 = arith.constant 0 : index
    %70 = vector.load %arg7[%c0_79, %c0_80] : memref<36x288xf32, #tpu.memory_space<vmem>>, vector<36x288xf32>
    %cst_81 = arith.constant dense<0.000000e+00> : vector<32x288xf32>
    %71 = tpu.matmul %0, %70, %cst_81 {dimension_numbers = #tpu.dot_dimension_numbers<[1], [0], [0], [1], [0, 0, 1, 1], [], []>, precision = #tpu.contract_precision<fp32>} : vector<32x36xf32>, vector<36x288xf32>, vector<32x288xf32> -> vector<32x288xf32>
    %72 = vector.broadcast %1 : vector<32x1xf32> to vector<32x288xf32>
    %73 = arith.addf %71, %72 : vector<32x288xf32>
    %cst_82 = arith.constant 0.000000e+00 : f32
    %74 = vector.broadcast %cst_82 : f32 to vector<32x288xf32>
    %75 = arith.maximumf %73, %74 : vector<32x288xf32>
    %cst_83 = arith.constant 9.99999997E-7 : f32
    %76 = vector.broadcast %cst_83 : f32 to vector<32x288xf32>
    %77 = arith.maximumf %75, %76 : vector<32x288xf32>
    %78 = arith.mulf %77, %77 : vector<32x288xf32>
    %79 = arith.mulf %78, %77 : vector<32x288xf32>
    %c0_84 = arith.constant 0 : index
    %c0_85 = arith.constant 0 : index
    %80 = vector.load %arg4[%c0_84, %c0_85] : memref<1x288xf32, #tpu.memory_space<vmem>>, vector<1x288xf32>
    %81 = vector.broadcast %80 : vector<1x288xf32> to vector<32x288xf32>
    %82 = arith.mulf %79, %81 : vector<32x288xf32>
    %cst_86 = arith.constant dense<0.000000e+00> : vector<32xf32>
    %83 = vector.multi_reduction <add>, %82, %cst_86 [1] : vector<32x288xf32> to vector<32xf32>
    %84 = vector.shape_cast %83 : vector<32xf32> to vector<32x1xf32>
    %cst_87 = arith.constant 3.906250e-03 : f32
    %85 = vector.broadcast %cst_87 : f32 to vector<32x1xf32>
    %86 = arith.mulf %84, %85 : vector<32x1xf32>
    %87 = math.log %86 : vector<32x1xf32>
    %cst_88 = arith.constant 0.333333343 : f32
    %88 = vector.broadcast %cst_88 : f32 to vector<32x1xf32>
    %89 = arith.mulf %87, %88 : vector<32x1xf32>
    %90 = math.exp %89 : vector<32x1xf32>
    %91 = arith.mulf %90, %90 : vector<32x1xf32>
    %cst_89 = arith.constant dense<0.000000e+00> : vector<1xf32>
    %92 = vector.multi_reduction <add>, %91, %cst_89 [0] : vector<32x1xf32> to vector<1xf32>
    %93 = vector.shape_cast %92 : vector<1xf32> to vector<1x1xf32>
    %94 = math.sqrt %93 : vector<1x1xf32>
    %cst_90 = arith.constant 9.99999996E-13 : f32
    %95 = vector.broadcast %cst_90 : f32 to vector<1x1xf32>
    %96 = arith.maximumf %94, %95 : vector<1x1xf32>
    %97 = vector.broadcast %96 : vector<1x1xf32> to vector<32x1xf32>
    %98 = arith.divf %90, %97 : vector<32x1xf32>
    %99 = vector.shape_cast %98 : vector<32x1xf32> to vector<1x1x32xf32>
    %c0_91 = arith.constant 0 : index
    %c0_92 = arith.constant 0 : index
    %c0_93 = arith.constant 0 : index
    %100 = vector.load %arg5[%c0_91, %c0_92, %c0_93] : memref<1x1x32xf32, #tpu.memory_space<vmem>>, vector<1x1x32xf32>
    tpu.vector_store %arg5[%c0_91, %c0_92, %c0_93], %99 {strides = array<i32>} : memref<1x1x32xf32, #tpu.memory_space<vmem>>, vector<1x1x32xf32>,
    return
  }
  func.func @transform_0(%arg0: i32) -> (i32, i32, i32) {
    %c0_i32 = arith.constant 0 : i32
    %c0_i32_0 = arith.constant 0 : i32
    %c0_i32_1 = arith.constant 0 : i32
    return %arg0, %c0_i32, %c0_i32_0 : i32, i32, i32
  }
  func.func @transform_1(%arg0: i32) -> (i32, i32) {
    %c0_i32 = arith.constant 0 : i32
    %c0_i32_0 = arith.constant 0 : i32
    %c0_i32_1 = arith.constant 0 : i32
    return %c0_i32, %c0_i32_0 : i32, i32
  }
  func.func @transform_2(%arg0: i32) -> (i32, i32) {
    %c0_i32 = arith.constant 0 : i32
    %c0_i32_0 = arith.constant 0 : i32
    %c0_i32_1 = arith.constant 0 : i32
    return %c0_i32, %c0_i32_0 : i32, i32
  }
  func.func @transform_3(%arg0: i32) -> (i32, i32) {
    %c0_i32 = arith.constant 0 : i32
    %c0_i32_0 = arith.constant 0 : i32
    %c0_i32_1 = arith.constant 0 : i32
    return %c0_i32, %c0_i32_0 : i32, i32
  }
  func.func @transform_4(%arg0: i32) -> (i32, i32, i32) {
    %c0_i32 = arith.constant 0 : i32
    %c0_i32_0 = arith.constant 0 : i32
    %c0_i32_1 = arith.constant 0 : i32
    return %arg0, %c0_i32, %c0_i32_0 : i32, i32, i32
  }
}

</mosaic_0001>

<llo_original>
// kernel: tpu_custom_call.1
$region0: #{tpu_custom_call.1}
  #allocation0 [shape = 'u32[]', space=smem, size = 0x4, offset = 0x4, fixed_abs, tag = 'smem constant byte address 0x4 - core index']
  #allocation1 [shape = 'u32[144,128]{1,0:T(1,128)}', space=vmem, size = 0x12000, scoped, tag = 'internal scratch']
  #allocation2 [shape = 'f32[4,342]{1,0:T(4,128)}', space=vmem, size = 0x1800, scoped, tag = 'scratch operand']
  #allocation3 [shape = 'f32[36,288]{1,0:T(8,128)}', space=vmem, size = 0xf000, scoped, tag = 'scratch operand']
  %s0 = inlined_call_operand.hbm [shape: f32[2,4,256], index: 0, kind: input, shape index: {}]
  %s1 = inlined_call_operand.vmem [shape: f32[32,36], index: 1, kind: input, shape index: {}]
  %s2 = inlined_call_operand.vmem [shape: f32[32,1], index: 2, kind: input, shape index: {}]
  %s3 = inlined_call_operand.vmem [shape: f32[1,288], index: 3, kind: input, shape index: {}]
  %s4 = inlined_call_operand.hbm [shape: f32[2,1,32], index: 4, kind: output, shape index: {}]
  %s5 = sld [smem:[#allocation0]]
  $region53: #{tpu_custom_call.1} parent=0
    _
  %s7 = ssub.s32 1, %s5
  %s8 = scalar_select 0, %s7, %s5
  $region1: #{tpu_custom_call.1} parent=0
    #allocation4 [shape = 'u8[8192]{0}', space=vmem, size = 0x2000, scoped, tag = 'input window, operand 0']
    #allocation5 [shape = 's32[2]{0}', space=sflag, size = 0x8, scoped, tag = 'scoped memory for tpu_custom_call.1']
    #allocation6 [shape = 's32[2]{0}', space=sflag, size = 0x8, scoped, tag = 'scoped memory for tpu_custom_call.1']
    #allocation7 [shape = 'u8[1024]{0}', space=vmem, size = 0x400, scoped, tag = 'output window, operand 0']
    %9 = vsyncpa [#allocation5], 0
    %s10 = scalar_lea.sflag [#allocation5], 1
    %11 = vsyncpa %s10, 0
    %12 = vsyncpa [#allocation6], 0
    %s13 = scalar_lea.sflag [#allocation6], 1
    %14 = vsyncpa %s13, 0
    loop: start=0, step=1, limit=4
    $region2: #{tpu_custom_call.1} parent=1 // loop_pre_header
      _
    $region3: #{tpu_custom_call.1} parent=1 // loop_header
      %s16 = sphi 0, %s20
      %p17 = scmp.ge.s32.totalorder %s16, 4
      %s26 = sphi 0, %s28
      %s29 = sphi 0, %s26
      %s30 = sphi 0, %s29
      %s46 = sphi 0, %s30
      %s50 = sphi 0, %s50
      %s52 = sphi 0, %s50
      %s53 = sphi 0, %s52
      %s67 = sphi 0, %s53
      %s71 = sphi 0, %s71
      %s73 = sphi 0, %s71
      %s74 = sphi 0, %s73
      %s88 = sphi 0, %s74
      %s92 = sphi 0, %s92
      %s94 = sphi 0, %s92
      %s95 = sphi 0, %s94
      %s109 = sphi 0, %s95
      %s115 = sphi 0, %s117
      %s118 = sphi 0, %s115
      %s119 = sphi 0, %s118
      %s135 = sphi 0, %s119
    $region4: #{tpu_custom_call.1} parent=1 // loop_header_branch
      %19 = sbr.rel (%p17) target = $region8
    $region5: #{tpu_custom_call.1} parent=1 // loop_body
      %s21 = ssub.s32 %s16, 1
      %s22 = ssub.s32 %s16, 2
      %s23 = sadd.s32 %s16, 1
      %s24 = ssub.s32 %s16, %s23
      %p25 = scmp.eq.s32.totalorder %s24, 0
      %s27 = sadd.s32 %s26, 1
      %s28 = scalar_select %p25, %s26, %s27
      %p31 = pneg %p25
      %p32 = scmp.eq.s32.totalorder %s16, 1
      %p33 = por %p31, %p32
      %p34 = scmp.ne.s32.totalorder %s26, %s29
      %p35 = scmp.eq.s32.totalorder %s16, 0
      %p36 = por %p34, %p35
      %p37 = scmp.ne.s32.totalorder %s26, %s29
      %p38 = scmp.eq.s32.totalorder %s21, 1
      %p39 = por %p37, %p38
      %p40 = scmp.ne.s32.totalorder %s29, %s30
      %p41 = scmp.eq.s32.totalorder %s21, 0
      %p42 = por %p40, %p41
      %p43 = scmp.ne.s32.totalorder %s29, %s30
      %p44 = scmp.eq.s32.totalorder %s22, 1
      %p45 = por %p43, %p44
      %p47 = scmp.ne.s32.totalorder %s30, %s46
      %p48 = scmp.eq.s32.totalorder %s22, 0
      %p49 = por %p47, %p48
      %s51 = sadd.s32 %s50, 1
      %p54 = scmp.eq.s32.totalorder %s16, 1
      %p55 = scmp.ne.s32.totalorder %s50, %s52
      %p56 = scmp.eq.s32.totalorder %s16, 0
      %p57 = por %p55, %p56
      %p58 = scmp.ne.s32.totalorder %s50, %s52
      %p59 = scmp.eq.s32.totalorder %s21, 1
      %p60 = por %p58, %p59
      %p61 = scmp.ne.s32.totalorder %s52, %s53
      %p62 = scmp.eq.s32.totalorder %s21, 0
      %p63 = por %p61, %p62
      %p64 = scmp.ne.s32.totalorder %s52, %s53
      %p65 = scmp.eq.s32.totalorder %s22, 1
      %p66 = por %p64, %p65
      %p68 = scmp.ne.s32.totalorder %s53, %s67
      %p69 = scmp.eq.s32.totalorder %s22, 0
      %p70 = por %p68, %p69
      %s72 = sadd.s32 %s71, 1
      %p75 = scmp.eq.s32.totalorder %s16, 1
      %p76 = scmp.ne.s32.totalorder %s71, %s73
      %p77 = scmp.eq.s32.totalorder %s16, 0
      %p78 = por %p76, %p77
      %p79 = scmp.ne.s32.totalorder %s71, %s73
      %p80 = scmp.eq.s32.totalorder %s21, 1
      %p81 = por %p79, %p80
      %p82 = scmp.ne.s32.totalorder %s73, %s74
      %p83 = scmp.eq.s32.totalorder %s21, 0
      %p84 = por %p82, %p83
      %p85 = scmp.ne.s32.totalorder %s73, %s74
      %p86 = scmp.eq.s32.totalorder %s22, 1
      %p87 = por %p85, %p86
      %p89 = scmp.ne.s32.totalorder %s74, %s88
      %p90 = scmp.eq.s32.totalorder %s22, 0
      %p91 = por %p89, %p90
      %s93 = sadd.s32 %s92, 1
      %p96 = scmp.eq.s32.totalorder %s16, 1
      %p97 = scmp.ne.s32.totalorder %s92, %s94
      %p98 = scmp.eq.s32.totalorder %s16, 0
      %p99 = por %p97, %p98
      %p100 = scmp.ne.s32.totalorder %s92, %s94
      %p101 = scmp.eq.s32.totalorder %s21, 1
      %p102 = por %p100, %p101
      %p103 = scmp.ne.s32.totalorder %s94, %s95
      %p104 = scmp.eq.s32.totalorder %s21, 0
      %p105 = por %p103, %p104
      %p106 = scmp.ne.s32.totalorder %s94, %s95
      %p107 = scmp.eq.s32.totalorder %s22, 1
      %p108 = por %p106, %p107
      %p110 = scmp.ne.s32.totalorder %s95, %s109
      %p111 = scmp.eq.s32.totalorder %s22, 0
      %p112 = por %p110, %p111
      %s113 = ssub.s32 %s16, %s23
      %p114 = scmp.eq.s32.totalorder %s113, 0
      %s116 = sadd.s32 %s115, 1
      %s117 = scalar_select %p114, %s115, %s116
      %p120 = pneg %p114
      %p121 = scmp.eq.s32.totalorder %s16, 1
      %p122 = por %p120, %p121
      %p123 = scmp.ne.s32.totalorder %s115, %s118
      %p124 = scmp.eq.s32.totalorder %s16, 0
      %p125 = por %p123, %p124
      %p126 = scmp.ne.s32.totalorder %s115, %s118
      %p127 = scmp.eq.s32.totalorder %s21, 1
      %p128 = por %p126, %p127
      %p129 = scmp.ne.s32.totalorder %s118, %s119
      %p130 = scmp.eq.s32.totalorder %s21, 0
      %p131 = por %p129, %p130
      %p132 = scmp.ne.s32.totalorder %s118, %s119
      %p133 = scmp.eq.s32.totalorder %s22, 1
      %p134 = por %p132, %p133
      %p136 = scmp.ne.s32.totalorder %s119, %s135
      %p137 = scmp.eq.s32.totalorder %s22, 0
      %p138 = por %p136, %p137
      %p139 = scmp.le.s32.totalorder 1, %s16
      %p140 = scmp.lt.s32.totalorder %s16, 3
      %p141 = pnand %p139, %p140
      %p142 = pneg %p141
      // Predicated region
      $region9: #{tpu_custom_call.1} parent=5 // pred_check
        _
      $region10: #{tpu_custom_call.1} parent=5 // pred_check_branch
        %144 = sbr.rel (%p141) target = $region12
      $region11: #{tpu_custom_call.1} parent=5 // pred_region
        %s145 = ssub.s32 %s16, 1
        // Predicated region
        $region13: #{tpu_custom_call.1} parent=11 // pred_check
          %p146 = pneg %p63
        $region14: #{tpu_custom_call.1} parent=11 // pred_check_branch
          %148 = sbr.rel (%p146) target = $region16
        $region15: #{tpu_custom_call.1} parent=11 // pred_region
          _
        $region16: #{tpu_custom_call.1} parent=11 // pred_fallthru
          _
        // Predicated region
        $region17: #{tpu_custom_call.1} parent=11 // pred_check
          %p149 = pneg %p84
        $region18: #{tpu_custom_call.1} parent=11 // pred_check_branch
          %151 = sbr.rel (%p149) target = $region20
        $region19: #{tpu_custom_call.1} parent=11 // pred_region
          _
        $region20: #{tpu_custom_call.1} parent=11 // pred_fallthru
          _
        // Predicated region
        $region21: #{tpu_custom_call.1} parent=11 // pred_check
          %p152 = pneg %p105
        $region22: #{tpu_custom_call.1} parent=11 // pred_check_branch
          %154 = sbr.rel (%p152) target = $region24
        $region23: #{tpu_custom_call.1} parent=11 // pred_region
          _
        $region24: #{tpu_custom_call.1} parent=11 // pred_fallthru
          _
      $region12: #{tpu_custom_call.1} parent=5 // pred_fallthru
        _
      %p155 = scmp.lt.s32.totalorder %s16, 2
      // Predicated region
      $region25: #{tpu_custom_call.1} parent=5 // pred_check
        %p156 = pneg %p155
      $region26: #{tpu_custom_call.1} parent=5 // pred_check_branch
        %158 = sbr.rel (%p156) target = $region28
      $region27: #{tpu_custom_call.1} parent=5 // pred_region
        // Predicated region
        $region29: #{tpu_custom_call.1} parent=27 // pred_check
          %p159 = pneg %p36
        $region30: #{tpu_custom_call.1} parent=27 // pred_check_branch
          %161 = sbr.rel (%p159) target = $region32
        $region31: #{tpu_custom_call.1} parent=27 // pred_region
          %s162 = sand.u32 %s26, 1
          %s163 = scalar_lea.sflag [#allocation5], %s162
          %s164 = sand.u32 %s26, 1
          %s165 = smul.addr %s164, 8
          %s166 = scalar_lea.vmem [#allocation4], %s165
          %s168 = ssub.s32 128, 128
          %169 = vsyncadd %s163, %s168
          %s170 = smul.addr %s16, 2
          %s171 = smul.addr %s170, 64
          %s172 = scalar_lea.hbm %s0, %s171
          %s174 = sshll.u32 %s166, 4
          %s175 = int_to_ptr.vmem [resolvable:$true] %s174
          %177 = dma.hbm_to_vmem [thread:$0]  %s172, 128, %s175, %s163
        $region32: #{tpu_custom_call.1} parent=27 // pred_fallthru
          _
      $region28: #{tpu_custom_call.1} parent=5 // pred_fallthru
        _
      %p178 = scmp.le.s32.totalorder 1, %s16
      %p179 = scmp.lt.s32.totalorder %s16, 3
      %p180 = pnand %p178, %p179
      %p181 = pneg %p180
      // Predicated region
      $region33: #{tpu_custom_call.1} parent=5 // pred_check
        _
      $region34: #{tpu_custom_call.1} parent=5 // pred_check_branch
        %183 = sbr.rel (%p180) target = $region36
      $region35: #{tpu_custom_call.1} parent=5 // pred_region
        %s184 = ssub.s32 %s16, 1
        %s185 = sand.u32 %s29, 1
        %s186 = scalar_lea.sflag [#allocation5], %s185
        %s187 = sand.u32 %s29, 1
        %s188 = smul.addr %s187, 8
        %s189 = scalar_lea.vmem [#allocation4], %s188
        // Predicated region
        $region37: #{tpu_custom_call.1} parent=35 // pred_check
          %p190 = pneg %p42
        $region38: #{tpu_custom_call.1} parent=35 // pred_check_branch
          %192 = sbr.rel (%p190) target = $region40
        $region39: #{tpu_custom_call.1} parent=35 // pred_region
          %193 = dma.done %s186, 128
        $region40: #{tpu_custom_call.1} parent=35 // pred_fallthru
          _
        %s194 = sand.u32 %s29, 1
        %s195 = scalar_lea.sflag [#allocation5], %s194
        %s196 = sand.u32 %s29, 1
        %s197 = smul.addr %s196, 8
        %s198 = scalar_lea.vmem [#allocation4], %s197
        %p199 = pneg %p42
        %p200 = pneg %p39
        %p201 = pneg %p63
        %p202 = pneg %p60
        %p203 = pneg %p84
        %p204 = pneg %p81
        %p205 = pneg %p105
        %p206 = pneg %p102
        %p207 = pneg %p131
        %p208 = pneg %p128
        %s209 = sand.u32 %s118, 1
        %s210 = scalar_lea.sflag [#allocation6], %s209
        %s211 = sand.u32 %s118, 1
        %s212 = scalar_lea.vmem [#allocation7], %s211
        %v213 = vld [vmem:[%s1] sm:$0xff]
        %v214 = vld [vmem:[%s1 + $0x8] sm:$0xff]
        %v215 = vld [vmem:[%s1 + $0x10] sm:$0xff]
        %v216 = vld [vmem:[%s1 + $0x18] sm:$0xff]
        %v217 = vld [vmem:[%s2] sm:$0xff]
        %v218 = vld [vmem:[%s2 + $0x8] sm:$0xff]
        %v219 = vld [vmem:[%s2 + $0x10] sm:$0xff]
        %v220 = vld [vmem:[%s2 + $0x18] sm:$0xff]
        %221 = vst [vmem:[#allocation2] sm:$0xff] 0.0
        %vm222 = vcmask 699392
        %223 = vst.msk [vmem:[#allocation2 + $0x8] sm:$0xf] %vm222, 0.0
        %v224 = vld [vmem:[%s189] sm:$0xf]
        %226 = vrot.lane.b32.xlu0 %v224, 19
        %v227 = vpop.permute.xlu0 %226
        %vm229 = vcmask 281752
        %230 = vst.msk [vmem:[#allocation2] sm:$0xf] %vm229, %v227
        %v231 = vld [vmem:[%s189] sm:$0xf]
        %233 = vrot.lane.b32.xlu0 %v231, 21
        %v234 = vpop.permute.xlu0 %233
        %vm236 = vcmask 429352
        %237 = vst.msk [vmem:[#allocation2] sm:$0xf] %vm236, %v234
        %v238 = vld [vmem:[%s189] sm:$0xf]
        %240 = vrot.lane.b32.xlu0 %v238, 23
        %v241 = vpop.permute.xlu0 %240
        %vm243 = vcmask 576952
        %244 = vst.msk [vmem:[#allocation2] sm:$0xf] %vm243, %v241
        %v245 = vld [vmem:[%s189] sm:$0xf]
        %247 = vrot.lane.b32.xlu0 %v245, 25
        %v248 = vpop.permute.xlu0 %247
        %vm250 = vcmask 724552
        %251 = vst.msk [vmem:[#allocation2] sm:$0xf] %vm250, %v248
        %v252 = vld [vmem:[%s189] sm:$0xf]
        %254 = vrot.lane.b32.xlu0 %v252, 27
        %v255 = vpop.permute.xlu0 %254
        %vm257 = vcmask 872152
        %258 = vst.msk [vmem:[#allocation2] sm:$0xf] %vm257, %v255
        %v259 = vld [vmem:[%s189] sm:$0xf]
        %261 = vrot.lane.b32.xlu0 %v259, 29
        %v262 = vpop.permute.xlu0 %261
        %vm264 = vcmask 1019752
        %265 = vst.msk [vmem:[#allocation2] sm:$0xf] %vm264, %v262
        %v266 = vld [vmem:[%s189] sm:$0xf]
        %268 = vrot.lane.b32.xlu0 %v266, 31
        %v269 = vpop.permute.xlu0 %268
        %v270 = vrot.slane %v269, 4
        %vm271 = vcmask 252928
        %v272 = vsel %vm271, %v270, %v269
        %vm274 = vcmask 1044472
        %vm275 = vcmask 121860
        %vm276 = vmor %vm275, %vm274
        %277 = vst.msk [vmem:[#allocation2] sm:$0xff] %vm276, %v272
        %v278 = vld [vmem:[%s189] sm:$0xf]
        %280 = vrot.lane.b32.xlu0 %v278, 33
        %v281 = vpop.permute.xlu0 %280
        %vm283 = vcmask 265352
        %284 = vst.msk [vmem:[#allocation2 + $0x4] sm:$0xf] %vm283, %v281
        %v285 = vld [vmem:[%s189 + $0x4] sm:$0xf]
        %287 = vrot.lane.b32.xlu0 %v285, 35
        %v288 = vpop.permute.xlu0 %287
        %vm290 = vcmask 412952
        %291 = vst.msk [vmem:[#allocation2 + $0x4] sm:$0xf] %vm290, %v288
        %v292 = vld [vmem:[%s189 + $0x4] sm:$0xf]
        %294 = vrot.lane.b32.xlu0 %v292, 37
        %v295 = vpop.permute.xlu0 %294
        %vm297 = vcmask 560552
        %298 = vst.msk [vmem:[#allocation2 + $0x4] sm:$0xf] %vm297, %v295
        %v299 = vld [vmem:[%s189 + $0x4] sm:$0xf]
        %301 = vrot.lane.b32.xlu0 %v299, 39
        %v302 = vpop.permute.xlu0 %301
        %vm304 = vcmask 708152
        %305 = vst.msk [vmem:[#allocation2 + $0x4] sm:$0xf] %vm304, %v302
        %v306 = vld [vmem:[%s189 + $0x4] sm:$0xf]
        %308 = vrot.lane.b32.xlu0 %v306, 41
        %v309 = vpop.permute.xlu0 %308
        %vm311 = vcmask 855752
        %312 = vst.msk [vmem:[#allocation2 + $0x4] sm:$0xf] %vm311, %v309
        %v313 = vld [vmem:[%s189 + $0x4] sm:$0xf]
        %315 = vrot.lane.b32.xlu0 %v313, 43
        %v316 = vpop.permute.xlu0 %315
        %vm318 = vcmask 1003352
        %319 = vst.msk [vmem:[#allocation2 + $0x4] sm:$0xf] %vm318, %v316
        %v320 = vld [vmem:[%s189 + $0x4] sm:$0xf]
        %322 = vrot.lane.b32.xlu0 %v320, 45
        %v323 = vpop.permute.xlu0 %322
        %v324 = vrot.slane %v323, 4
        %vm325 = vcmask 367616
        %v326 = vsel %vm325, %v324, %v323
        %vm328 = vcmask 1044456
        %vm329 = vcmask 105476
        %vm330 = vmor %vm329, %vm328
        %331 = vst.msk [vmem:[#allocation2 + $0x4] sm:$0xff] %vm330, %v326
        %v332 = vld [vmem:[%s189 + $0x4] sm:$0xf]
        %334 = vrot.lane.b32.xlu0 %v332, 47
        %v335 = vpop.permute.xlu0 %334
        %vm337 = vcmask 248952
        %338 = vst.msk [vmem:[#allocation2 + $0x8] sm:$0xf] %vm337, %v335
        %v339 = vld [vmem:[%s189 + $0x4] sm:$0xf]
        %341 = vrot.lane.b32.xlu0 %v339, 49
        %v342 = vpop.permute.xlu0 %341
        %vm344 = vcmask 396552
        %345 = vst.msk [vmem:[#allocation2 + $0x8] sm:$0xf] %vm344, %v342
        %v346 = vld [vmem:[#allocation2] sm:$0xff]
        %v347 = vld [vmem:[#allocation2 + $0x8] sm:$0xf]
        %v349 = vcombine.high %v346, %v346
        %351 = vst [vmem:[#allocation3] sm:$0xf] %v346
        %352 = vst [vmem:[#allocation3 + $0x8] sm:$0xf] %v349
        %vm353 = vcmask 257024
        %354 = vst.msk [vmem:[#allocation3 + $0x10] sm:$0xf] %vm353, %v347
        %v355 = vld [vmem:[#allocation2] sm:$0xff]
        %v356 = vld [vmem:[#allocation2 + $0x8] sm:$0xf]
        %v359 = vcombine.low %v355, %v355
        %v360 = vcombine.low %v356, %v356
        %361 = vrot.lane.b32.xlu0 %v359, 127
        %v362 = vpop.permute.xlu0 %361
        %363 = vrot.lane.b32.xlu0 %v355, 127
        %v364 = vpop.permute.xlu0 %363
        %365 = vrot.lane.b32.xlu0 %v360, 127
        %v366 = vpop.permute.xlu0 %365
        %vm367 = vcmask 1039360
        %v368 = vsel %vm367, %v362, %v364
        %v369 = vsel %vm367, %v364, %v366
        %373 = vst [vmem:[#allocation3] sm:$0xf0] %v368
        %374 = vst [vmem:[#allocation3 + $0x8] sm:$0xf0] %v369
        %vm375 = vcmask 261124
        %376 = vst.msk [vmem:[#allocation3 + $0x10] sm:$0xf0] %vm375, %v366
        %v377 = vld [vmem:[#allocation2] sm:$0xff]
        %v378 = vld [vmem:[#allocation2 + $0x8] sm:$0xf]
        %v381 = vcombine.high %v377, %v377
        %382 = vrot.lane.b32.xlu0 %v377, 126
        %v383 = vpop.permute.xlu0 %382
        %384 = vrot.lane.b32.xlu0 %v381, 126
        %v385 = vpop.permute.xlu0 %384
        %386 = vrot.lane.b32.xlu0 %v378, 126
        %v387 = vpop.permute.xlu0 %386
        %vm388 = vcmask 1031168
        %v389 = vsel %vm388, %v383, %v385
        %v390 = vsel %vm388, %v385, %v387
        %394 = vst [vmem:[#allocation3 + $0x18] sm:$0xf] %v389
        %395 = vst [vmem:[#allocation3 + $0x20] sm:$0xf] %v390
        %396 = vst.msk [vmem:[#allocation3 + $0x28] sm:$0xf] %vm353, %v387
        %v397 = vld [vmem:[#allocation2] sm:$0xff]
        %v398 = vld [vmem:[#allocation2 + $0x8] sm:$0xf]
        %v401 = vcombine.low %v397, %v397
        %v402 = vcombine.low %v398, %v398
        %403 = vrot.lane.b32.xlu0 %v401, 110
        %v404 = vpop.permute.xlu0 %403
        %405 = vrot.lane.b32.xlu0 %v397, 110
        %v406 = vpop.permute.xlu0 %405
        %407 = vrot.lane.b32.xlu0 %v402, 110
        %v408 = vpop.permute.xlu0 %407
        %vm409 = vcmask 900096
        %v410 = vsel %vm409, %v404, %v406
        %v411 = vsel %vm409, %v406, %v408
        %415 = vst [vmem:[#allocation3 + $0x18] sm:$0xf0] %v410
        %416 = vst [vmem:[#allocation3 + $0x20] sm:$0xf0] %v411
        %417 = vst.msk [vmem:[#allocation3 + $0x28] sm:$0xf0] %vm375, %v408
        %v418 = vld [vmem:[#allocation2] sm:$0xff]
        %v419 = vld [vmem:[#allocation2 + $0x8] sm:$0xf]
        %v422 = vcombine.high %v418, %v418
        %423 = vrot.lane.b32.xlu0 %v418, 109
        %v424 = vpop.permute.xlu0 %423
        %425 = vrot.lane.b32.xlu0 %v422, 109
        %v426 = vpop.permute.xlu0 %425
        %427 = vrot.lane.b32.xlu0 %v419, 109
        %v428 = vpop.permute.xlu0 %427
        %vm429 = vcmask 891904
        %v430 = vsel %vm429, %v424, %v426
        %v431 = vsel %vm429, %v426, %v428
        %435 = vst [vmem:[#allocation3 + $0x30] sm:$0xf] %v430
        %436 = vst [vmem:[#allocation3 + $0x38] sm:$0xf] %v431
        %437 = vst.msk [vmem:[#allocation3 + $0x40] sm:$0xf] %vm353, %v428
        %v438 = vld [vmem:[#allocation2] sm:$0xff]
        %v439 = vld [vmem:[#allocation2 + $0x8] sm:$0xf]
        %v442 = vcombine.low %v438, %v438
        %v443 = vcombine.low %v439, %v439
        %444 = vrot.lane.b32.xlu0 %v442, 108
        %v445 = vpop.permute.xlu0 %444
        %446 = vrot.lane.b32.xlu0 %v438, 108
        %v447 = vpop.permute.xlu0 %446
        %448 = vrot.lane.b32.xlu0 %v443, 108
        %v449 = vpop.permute.xlu0 %448
        %vm450 = vcmask 883712
        %v451 = vsel %vm450, %v445, %v447
        %v452 = vsel %vm450, %v447, %v449
        %456 = vst [vmem:[#allocation3 + $0x30] sm:$0xf0] %v451
        %457 = vst [vmem:[#allocation3 + $0x38] sm:$0xf0] %v452
        %458 = vst.msk [vmem:[#allocation3 + $0x40] sm:$0xf0] %vm375, %v449
        %v459 = vld [vmem:[#allocation2] sm:$0xff]
        %v460 = vld [vmem:[#allocation2 + $0x8] sm:$0xf]
        %v463 = vcombine.high %v459, %v459
        %464 = vrot.lane.b32.xlu0 %v459, 92
        %v465 = vpop.permute.xlu0 %464
        %466 = vrot.lane.b32.xlu0 %v463, 92
        %v467 = vpop.permute.xlu0 %466
        %468 = vrot.lane.b32.xlu0 %v460, 92
        %v469 = vpop.permute.xlu0 %468
        %vm470 = vcmask 752640
        %v471 = vsel %vm470, %v465, %v467
        %v472 = vsel %vm470, %v467, %v469
        %476 = vst [vmem:[#allocation3 + $0x48] sm:$0xf] %v471
        %477 = vst [vmem:[#allocation3 + $0x50] sm:$0xf] %v472
        %478 = vst.msk [vmem:[#allocation3 + $0x58] sm:$0xf] %vm353, %v469
        %v479 = vld [vmem:[#allocation2] sm:$0xff]
        %v480 = vld [vmem:[#allocation2 + $0x8] sm:$0xf]
        %v483 = vcombine.low %v479, %v479
        %v484 = vcombine.low %v480, %v480
        %485 = vrot.lane.b32.xlu0 %v483, 91
        %v486 = vpop.permute.xlu0 %485
        %487 = vrot.lane.b32.xlu0 %v479, 91
        %v488 = vpop.permute.xlu0 %487
        %489 = vrot.lane.b32.xlu0 %v484, 91
        %v490 = vpop.permute.xlu0 %489
        %vm491 = vcmask 744448
        %v492 = vsel %vm491, %v486, %v488
        %v493 = vsel %vm491, %v488, %v490
        %497 = vst [vmem:[#allocation3 + $0x48] sm:$0xf0] %v492
        %498 = vst [vmem:[#allocation3 + $0x50] sm:$0xf0] %v493
        %499 = vst.msk [vmem:[#allocation3 + $0x58] sm:$0xf0] %vm375, %v490
        %v500 = vld [vmem:[#allocation2] sm:$0xff]
        %v501 = vld [vmem:[#allocation2 + $0x8] sm:$0xf]
        %v504 = vcombine.high %v500, %v500
        %505 = vrot.lane.b32.xlu0 %v500, 90
        %v506 = vpop.permute.xlu0 %505
        %507 = vrot.lane.b32.xlu0 %v504, 90
        %v508 = vpop.permute.xlu0 %507
        %509 = vrot.lane.b32.xlu0 %v501, 90
        %v510 = vpop.permute.xlu0 %509
        %vm511 = vcmask 736256
        %v512 = vsel %vm511, %v506, %v508
        %v513 = vsel %vm511, %v508, %v510
        %517 = vst [vmem:[#allocation3 + $0x60] sm:$0xf] %v512
        %518 = vst [vmem:[#allocation3 + $0x68] sm:$0xf] %v513
        %519 = vst.msk [vmem:[#allocation3 + $0x70] sm:$0xf] %vm353, %v510
        %v520 = vld [vmem:[#allocation3] sm:$0xff]
        %v521 = vld [vmem:[#allocation3 + $0x8] sm:$0xff]
        %v522 = vld [vmem:[#allocation3 + $0x10] sm:$0xff]
        %v523 = vld [vmem:[#allocation3 + $0x18] sm:$0xff]
        %v524 = vld [vmem:[#allocation3 + $0x20] sm:$0xff]
        %v525 = vld [vmem:[#allocation3 + $0x28] sm:$0xff]
        %v526 = vld [vmem:[#allocation3 + $0x30] sm:$0xff]
        %v527 = vld [vmem:[#allocation3 + $0x38] sm:$0xff]
        %v528 = vld [vmem:[#allocation3 + $0x40] sm:$0xff]
        %v529 = vld [vmem:[#allocation3 + $0x48] sm:$0xff]
        %v530 = vld [vmem:[#allocation3 + $0x50] sm:$0xff]
        %v531 = vld [vmem:[#allocation3 + $0x58] sm:$0xff]
        %v532 = vld [vmem:[#allocation3 + $0x60] sm:$0xf]
        %v533 = vld [vmem:[#allocation3 + $0x68] sm:$0xf]
        %v534 = vld [vmem:[#allocation3 + $0x70] sm:$0xf]
        %536 = vset.pattern.permute.xlu0 0
        %537 = vperm.xlu0 %536, %v217
        %v538 = vpop.permute.xlu0 %537
        %541 = vset.pattern.permute.xlu0 0
        %542 = vperm.xlu0 %541, %v218
        %v543 = vpop.permute.xlu0 %542
        %546 = vset.pattern.permute.xlu0 0
        %547 = vperm.xlu0 %546, %v219
        %v548 = vpop.permute.xlu0 %547
        %551 = vset.pattern.permute.xlu0 0
        %552 = vperm.xlu0 %551, %v220
        %v553 = vpop.permute.xlu0 %552
        %vm555 = vcmask 293888
        %v557 = vsel %vm555, %v213, 0
        %v560 = vsel %vm555, %v214, 0
        %v563 = vsel %vm555, %v215, 0
        %v566 = vsel %vm555, %v216, 0
        %vm568 = vcmask 1043456
        %v570 = vsel %vm568, %v532, 0
        %v573 = vsel %vm568, %v533, 0
        %v576 = vsel %vm568, %v534, 0
        %v578 = vand.u32 %v521, 4294901760
        %579 = vmatprep.subr.mxu0 %v578
        %v580 = vand.u32 %v520, 4294901760
        %581 = vmatpush1.msra.mxu0 %v580
        %v582 = vand.u32 %v524, 4294901760
        %583 = vmatprep.subr.mxu0 %v582
        %v584 = vand.u32 %v523, 4294901760
        %585 = vmatpush1.msra.mxu0 %v584
        %v586 = vand.u32 %v527, 4294901760
        %587 = vmatprep.subr.mxu0 %v586
        %v588 = vand.u32 %v526, 4294901760
        %589 = vmatpush1.msra.mxu0 %v588
        %v590 = vand.u32 %v530, 4294901760
        %591 = vmatprep.subr.mxu0 %v590
        %v592 = vand.u32 %v529, 4294901760
        %593 = vmatpush1.msra.mxu0 %v592
        %v594 = vand.u32 %v573, 4294901760
        %595 = vmatprep.subr.mxu0 %v594
        %v596 = vand.u32 %v570, 4294901760
        %597 = vmatpush1.msra.mxu0 %v596
        %598 = vmatprep.subr.mxu0 0.0
        %599 = vmatpush1.msra.mxu0 0.0
        %600 = vmatprep.subr.mxu0 0.0
        %601 = vmatpush1.msra.mxu0 0.0
        %602 = vmatprep.subr.mxu0 0.0
        %603 = vmatpush1.msra.mxu0 0.0
        %604 = vmatprep.subr.mxu0 0.0
        %605 = vmatpush1.msra.mxu0 0.0
        %606 = vmatprep.subr.mxu0 0.0
        %607 = vmatpush1.msra.mxu0 0.0
        %608 = vmatprep.subr.mxu0 0.0
        %609 = vmatpush1.msra.mxu0 0.0
        %610 = vmatprep.subr.mxu0 0.0
        %611 = vmatpush1.msra.mxu0 0.0
        %612 = vmatprep.subr.mxu0 0.0
        %613 = vmatpush1.msra.mxu0 0.0
        %614 = vmatprep.subr.mxu0 0.0
        %615 = vmatpush1.msra.mxu0 0.0
        %616 = vmatprep.subr.mxu0 0.0
        %617 = vmatpush1.msra.mxu0 0.0
        %618 = vmatprep.subr.mxu0 0.0
        %619 = vmatpush1.msra.mxu0 0.0
        %620 = vmatprep.subr.mxu0 0.0
        %621 = vmatpush1.msra.mxu0 0.0
        %622 = vmatprep.subr.mxu0 0.0
        %623 = vmatpush1.msra.mxu0 0.0
        %624 = vmatprep.subr.mxu0 0.0
        %625 = vmatpush1.msra.mxu0 0.0
        %626 = vmatprep.subr.mxu0 0.0
        %627 = vmatpush1.msra.mxu0 0.0
        %628 = vmatprep.subr.mxu0 0.0
        %629 = vmatpush1.msra.mxu0 0.0
        %630 = vmatprep.subr.mxu0 0.0
        %631 = vmatpush1.msra.mxu0 0.0
        %632 = vmatprep.subr.mxu0 0.0
        %633 = vmatpush1.msra.mxu0 0.0
        %634 = vmatprep.subr.mxu0 0.0
        %635 = vmatpush1.msra.mxu0 0.0
        %636 = vmatprep.subr.mxu0 0.0
        %637 = vmatpush1.msra.mxu0 0.0
        %638 = vmatprep.subr.mxu0 0.0
        %639 = vmatpush1.msra.mxu0 0.0
        %640 = vmatprep.subr.mxu0 0.0
        %641 = vmatpush1.msra.mxu0 0.0
        %642 = vmatprep.subr.mxu0 0.0
        %643 = vmatpush1.msra.mxu0 0.0
        %644 = vmatprep.subr.mxu0 0.0
        %645 = vmatpush1.msra.mxu0 0.0
        %646 = vmatprep.subr.mxu0 0.0
        %647 = vmatpush1.msra.mxu0 0.0
        %648 = vmatprep.subr.mxu0 0.0
        %649 = vmatpush1.msra.mxu0 0.0
        %650 = vmatprep.subr.mxu0 0.0
        %651 = vmatpush1.msra.mxu0 0.0
        %652 = vmatprep.mubr.f32.mxu0 0.0
        %v653 = vand.u32 %v557, 4294901760
        %v654 = vsub.f32 %v557, %v653
        %v655 = vand.u32 %v654, 4294901760
        %v656 = vsub.f32 %v654, %v655
        %v657 = vand.u32 %v656, 4294901760
        %658 = vmatmul.mubr.f32.gmra.mrb[0].mxu0 %v657
        %v659 = vpop.f32.mrb[0].mxu0
        %v660 = vadd.f32 %v538, %v659
        %v661 = vpop.f32.mrb[0].mxu0
        %v662 = vadd.f32 %v538, %v661
        %663 = vmatprep.mubr.f32.mxu0 0.0
        %v664 = vand.u32 %v560, 4294901760
        %v665 = vsub.f32 %v560, %v664
        %v666 = vand.u32 %v665, 4294901760
        %v667 = vsub.f32 %v665, %v666
        %v668 = vand.u32 %v667, 4294901760
        %669 = vmatmul.mubr.f32.gmra.mrb[0].mxu0 %v668
        %v670 = vpop.f32.mrb[0].mxu0
        %v671 = vadd.f32 %v543, %v670
        %v672 = vpop.f32.mrb[0].mxu0
        %v673 = vadd.f32 %v543, %v672
        %674 = vmatprep.mubr.f32.mxu0 0.0
        %v675 = vand.u32 %v563, 4294901760
        %v676 = vsub.f32 %v563, %v675
        %v677 = vand.u32 %v676, 4294901760
        %v678 = vsub.f32 %v676, %v677
        %v679 = vand.u32 %v678, 4294901760
        %680 = vmatmul.mubr.f32.gmra.mrb[0].mxu0 %v679
        %v681 = vpop.f32.mrb[0].mxu0
        %v682 = vadd.f32 %v548, %v681
        %v683 = vpop.f32.mrb[0].mxu0
        %v684 = vadd.f32 %v548, %v683
        %685 = vmatprep.mubr.f32.mxu0 0.0
        %v686 = vand.u32 %v566, 4294901760
        %v687 = vsub.f32 %v566, %v686
        %v688 = vand.u32 %v687, 4294901760
        %v689 = vsub.f32 %v687, %v688
        %v690 = vand.u32 %v689, 4294901760
        %691 = vmatmul.mubr.f32.gmra.mrb[0].mxu0 %v690
        %v692 = vpop.f32.mrb[0].mxu0
        %v693 = vadd.f32 %v553, %v692
        %v694 = vpop.f32.mrb[0].mxu0
        %v695 = vadd.f32 %v553, %v694
        %696 = vdwg.mxu0
        %v697 = vand.u32 %v521, 4294901760
        %v698 = vsub.f32 %v521, %v697
        %v699 = vand.u32 %v698, 4294901760
        %v700 = vsub.f32 %v698, %v699
        %v701 = vand.u32 %v700, 4294901760
        %702 = vmatprep.subr.mxu0 %v701
        %v703 = vand.u32 %v520, 4294901760
        %v704 = vsub.f32 %v520, %v703
        %v705 = vand.u32 %v704, 4294901760
        %v706 = vsub.f32 %v704, %v705
        %v707 = vand.u32 %v706, 4294901760
        %708 = vmatpush1.msra.mxu0 %v707
        %v709 = vand.u32 %v524, 4294901760
        %v710 = vsub.f32 %v524, %v709
        %v711 = vand.u32 %v710, 4294901760
        %v712 = vsub.f32 %v710, %v711
        %v713 = vand.u32 %v712, 4294901760
        %714 = vmatprep.subr.mxu0 %v713
        %v715 = vand.u32 %v523, 4294901760
        %v716 = vsub.f32 %v523, %v715
        %v717 = vand.u32 %v716, 4294901760
        %v718 = vsub.f32 %v716, %v717
        %v719 = vand.u32 %v718, 4294901760
        %720 = vmatpush1.msra.mxu0 %v719
        %v721 = vand.u32 %v527, 4294901760
        %v722 = vsub.f32 %v527, %v721
        %v723 = vand.u32 %v722, 4294901760
        %v724 = vsub.f32 %v722, %v723
        %v725 = vand.u32 %v724, 4294901760
        %726 = vmatprep.subr.mxu0 %v725
        %v727 = vand.u32 %v526, 4294901760
        %v728 = vsub.f32 %v526, %v727
        %v729 = vand.u32 %v728, 4294901760
        %v730 = vsub.f32 %v728, %v729
        %v731 = vand.u32 %v730, 4294901760
        %732 = vmatpush1.msra.mxu0 %v731
        %v733 = vand.u32 %v530, 4294901760
        %v734 = vsub.f32 %v530, %v733
        %v735 = vand.u32 %v734, 4294901760
        %v736 = vsub.f32 %v734, %v735
        %v737 = vand.u32 %v736, 4294901760
        %738 = vmatprep.subr.mxu0 %v737
        %v739 = vand.u32 %v529, 4294901760
        %v740 = vsub.f32 %v529, %v739
        %v741 = vand.u32 %v740, 4294901760
        %v742 = vsub.f32 %v740, %v741
        %v743 = vand.u32 %v742, 4294901760
        %744 = vmatpush1.msra.mxu0 %v743
        %v745 = vand.u32 %v573, 4294901760
        %v746 = vsub.f32 %v573, %v745
        %v747 = vand.u32 %v746, 4294901760
        %v748 = vsub.f32 %v746, %v747
        %v749 = vand.u32 %v748, 4294901760
        %750 = vmatprep.subr.mxu0 %v749
        %v751 = vand.u32 %v570, 4294901760
        %v752 = vsub.f32 %v570, %v751
        %v753 = vand.u32 %v752, 4294901760
        %v754 = vsub.f32 %v752, %v753
        %v755 = vand.u32 %v754, 4294901760
        %756 = vmatpush1.msra.mxu0 %v755
        %757 = vmatprep.subr.mxu0 0.0
        %758 = vmatpush1.msra.mxu0 0.0
        %759 = vmatprep.subr.mxu0 0.0
        %760 = vmatpush1.msra.mxu0 0.0
        %761 = vmatprep.subr.mxu0 0.0
        %762 = vmatpush1.msra.mxu0 0.0
        %763 = vmatprep.subr.mxu0 0.0
        %764 = vmatpush1.msra.mxu0 0.0
        %765 = vmatprep.subr.mxu0 0.0
        %766 = vmatpush1.msra.mxu0 0.0
        %767 = vmatprep.subr.mxu0 0.0
        %768 = vmatpush1.msra.mxu0 0.0
        %769 = vmatprep.subr.mxu0 0.0
        %770 = vmatpush1.msra.mxu0 0.0
        %771 = vmatprep.subr.mxu0 0.0
        %772 = vmatpush1.msra.mxu0 0.0
        %773 = vmatprep.subr.mxu0 0.0
        %774 = vmatpush1.msra.mxu0 0.0
        %775 = vmatprep.subr.mxu0 0.0
        %776 = vmatpush1.msra.mxu0 0.0
        %777 = vmatprep.subr.mxu0 0.0
        %778 = vmatpush1.msra.mxu0 0.0
        %779 = vmatprep.subr.mxu0 0.0
        %780 = vmatpush1.msra.mxu0 0.0
        %781 = vmatprep.subr.mxu0 0.0
        %782 = vmatpush1.msra.mxu0 0.0
        %783 = vmatprep.subr.mxu0 0.0
        %784 = vmatpush1.msra.mxu0 0.0
        %785 = vmatprep.subr.mxu0 0.0
        %786 = vmatpush1.msra.mxu0 0.0
        %787 = vmatprep.subr.mxu0 0.0
        %788 = vmatpush1.msra.mxu0 0.0
        %789 = vmatprep.subr.mxu0 0.0
        %790 = vmatpush1.msra.mxu0 0.0
        %791 = vmatprep.subr.mxu0 0.0
        %792 = vmatpush1.msra.mxu0 0.0
        %793 = vmatprep.subr.mxu0 0.0
        %794 = vmatpush1.msra.mxu0 0.0
        %795 = vmatprep.subr.mxu0 0.0
        %796 = vmatpush1.msra.mxu0 0.0
        %797 = vmatprep.subr.mxu0 0.0
        %798 = vmatpush1.msra.mxu0 0.0
        %799 = vmatprep.subr.mxu0 0.0
        %800 = vmatpush1.msra.mxu0 0.0
        %801 = vmatprep.subr.mxu0 0.0
        %802 = vmatpush1.msra.mxu0 0.0
        %803 = vmatprep.subr.mxu0 0.0
        %804 = vmatpush1.msra.mxu0 0.0
        %805 = vmatprep.subr.mxu0 0.0
        %806 = vmatpush1.msra.mxu0 0.0
        %807 = vmatprep.subr.mxu0 0.0
        %808 = vmatpush1.msra.mxu0 0.0
        %809 = vmatprep.subr.mxu0 0.0
        %810 = vmatpush1.msra.mxu0 0.0
        %811 = vmatprep.mubr.f32.mxu0 0.0
        %v812 = vand.u32 %v557, 4294901760
        %813 = vmatmul.mubr.f32.gmra.mrb[0].mxu0 %v812
        %v814 = vpop.f32.mrb[0].mxu0
        %v815 = vadd.f32 %v660, %v814
        %v816 = vpop.f32.mrb[0].mxu0
        %v817 = vadd.f32 %v662, %v816
        %818 = vmatprep.mubr.f32.mxu0 0.0
        %v819 = vand.u32 %v560, 4294901760
        %820 = vmatmul.mubr.f32.gmra.mrb[0].mxu0 %v819
        %v821 = vpop.f32.mrb[0].mxu0
        %v822 = vadd.f32 %v671, %v821
        %v823 = vpop.f32.mrb[0].mxu0
        %v824 = vadd.f32 %v673, %v823
        %825 = vmatprep.mubr.f32.mxu0 0.0
        %v826 = vand.u32 %v563, 4294901760
        %827 = vmatmul.mubr.f32.gmra.mrb[0].mxu0 %v826
        %v828 = vpop.f32.mrb[0].mxu0
        %v829 = vadd.f32 %v682, %v828
        %v830 = vpop.f32.mrb[0].mxu0
        %v831 = vadd.f32 %v684, %v830
        %832 = vmatprep.mubr.f32.mxu0 0.0
        %v833 = vand.u32 %v566, 4294901760
        %834 = vmatmul.mubr.f32.gmra.mrb[0].mxu0 %v833
        %v835 = vpop.f32.mrb[0].mxu0
        %v836 = vadd.f32 %v693, %v835
        %v837 = vpop.f32.mrb[0].mxu0
        %v838 = vadd.f32 %v695, %v837
        %839 = vdwg.mxu0
        %v840 = vand.u32 %v521, 4294901760
        %v841 = vsub.f32 %v521, %v840
        %842 = vmatprep.subr.mxu0 %v841
        %v843 = vand.u32 %v520, 4294901760
        %v844 = vsub.f32 %v520, %v843
        %845 = vmatpush1.msra.mxu0 %v844
        %v846 = vand.u32 %v524, 4294901760
        %v847 = vsub.f32 %v524, %v846
        %848 = vmatprep.subr.mxu0 %v847
        %v849 = vand.u32 %v523, 4294901760
        %v850 = vsub.f32 %v523, %v849
        %851 = vmatpush1.msra.mxu0 %v850
        %v852 = vand.u32 %v527, 4294901760
        %v853 = vsub.f32 %v527, %v852
        %854 = vmatprep.subr.mxu0 %v853
        %v855 = vand.u32 %v526, 4294901760
        %v856 = vsub.f32 %v526, %v855
        %857 = vmatpush1.msra.mxu0 %v856
        %v858 = vand.u32 %v530, 4294901760
        %v859 = vsub.f32 %v530, %v858
        %860 = vmatprep.subr.mxu0 %v859
        %v861 = vand.u32 %v529, 4294901760
        %v862 = vsub.f32 %v529, %v861
        %863 = vmatpush1.msra.mxu0 %v862
        %v864 = vand.u32 %v573, 4294901760
        %v865 = vsub.f32 %v573, %v864
        %866 = vmatprep.subr.mxu0 %v865
        %v867 = vand.u32 %v570, 4294901760
        %v868 = vsub.f32 %v570, %v867
        %869 = vmatpush1.msra.mxu0 %v868
        %870 = vmatprep.subr.mxu0 0.0
        %871 = vmatpush1.msra.mxu0 0.0
        %872 = vmatprep.subr.mxu0 0.0
        %873 = vmatpush1.msra.mxu0 0.0
        %874 = vmatprep.subr.mxu0 0.0
        %875 = vmatpush1.msra.mxu0 0.0
        %876 = vmatprep.subr.mxu0 0.0
        %877 = vmatpush1.msra.mxu0 0.0
        %878 = vmatprep.subr.mxu0 0.0
        %879 = vmatpush1.msra.mxu0 0.0
        %880 = vmatprep.subr.mxu0 0.0
        %881 = vmatpush1.msra.mxu0 0.0
        %882 = vmatprep.subr.mxu0 0.0
        %883 = vmatpush1.msra.mxu0 0.0
        %884 = vmatprep.subr.mxu0 0.0
        %885 = vmatpush1.msra.mxu0 0.0
        %886 = vmatprep.subr.mxu0 0.0
        %887 = vmatpush1.msra.mxu0 0.0
        %888 = vmatprep.subr.mxu0 0.0
        %889 = vmatpush1.msra.mxu0 0.0
        %890 = vmatprep.subr.mxu0 0.0
        %891 = vmatpush1.msra.mxu0 0.0
        %892 = vmatprep.subr.mxu0 0.0
        %893 = vmatpush1.msra.mxu0 0.0
        %894 = vmatprep.subr.mxu0 0.0
        %895 = vmatpush1.msra.mxu0 0.0
        %896 = vmatprep.subr.mxu0 0.0
        %897 = vmatpush1.msra.mxu0 0.0
        %898 = vmatprep.subr.mxu0 0.0
        %899 = vmatpush1.msra.mxu0 0.0
        %900 = vmatprep.subr.mxu0 0.0
        %901 = vmatpush1.msra.mxu0 0.0
        %902 = vmatprep.subr.mxu0 0.0
        %903 = vmatpush1.msra.mxu0 0.0
        %904 = vmatprep.subr.mxu0 0.0
        %905 = vmatpush1.msra.mxu0 0.0
        %906 = vmatprep.subr.mxu0 0.0
        %907 = vmatpush1.msra.mxu0 0.0
        %908 = vmatprep.subr.mxu0 0.0
        %909 = vmatpush1.msra.mxu0 0.0
        %910 = vmatprep.subr.mxu0 0.0
        %911 = vmatpush1.msra.mxu0 0.0
        %912 = vmatprep.subr.mxu0 0.0
        %913 = vmatpush1.msra.mxu0 0.0
        %914 = vmatprep.subr.mxu0 0.0
        %915 = vmatpush1.msra.mxu0 0.0
        %916 = vmatprep.subr.mxu0 0.0
        %917 = vmatpush1.msra.mxu0 0.0
        %918 = vmatprep.subr.mxu0 0.0
        %919 = vmatpush1.msra.mxu0 0.0
        %920 = vmatprep.subr.mxu0 0.0
        %921 = vmatpush1.msra.mxu0 0.0
        %922 = vmatprep.subr.mxu0 0.0
        %923 = vmatpush1.msra.mxu0 0.0
        %924 = vmatprep.mubr.f32.mxu0 0.0
        %v925 = vand.u32 %v557, 4294901760
        %v926 = vsub.f32 %v557, %v925
        %927 = vmatmul.mubr.f32.gmra.mrb[0].mxu0 %v926
        %v928 = vpop.f32.mrb[0].mxu0
        %v929 = vadd.f32 %v815, %v928
        %v930 = vpop.f32.mrb[0].mxu0
        %v931 = vadd.f32 %v817, %v930
        %932 = vmatprep.mubr.f32.mxu0 0.0
        %v933 = vand.u32 %v560, 4294901760
        %v934 = vsub.f32 %v560, %v933
        %935 = vmatmul.mubr.f32.gmra.mrb[0].mxu0 %v934
        %v936 = vpop.f32.mrb[0].mxu0
        %v937 = vadd.f32 %v822, %v936
        %v938 = vpop.f32.mrb[0].mxu0
        %v939 = vadd.f32 %v824, %v938
        %940 = vmatprep.mubr.f32.mxu0 0.0
        %v941 = vand.u32 %v563, 4294901760
        %v942 = vsub.f32 %v563, %v941
        %943 = vmatmul.mubr.f32.gmra.mrb[0].mxu0 %v942
        %v944 = vpop.f32.mrb[0].mxu0
        %v945 = vadd.f32 %v829, %v944
        %v946 = vpop.f32.mrb[0].mxu0
        %v947 = vadd.f32 %v831, %v946
        %948 = vmatprep.mubr.f32.mxu0 0.0
        %v949 = vand.u32 %v566, 4294901760
        %v950 = vsub.f32 %v566, %v949
        %951 = vmatmul.mubr.f32.gmra.mrb[0].mxu0 %v950
        %v952 = vpop.f32.mrb[0].mxu0
        %v953 = vadd.f32 %v836, %v952
        %v954 = vpop.f32.mrb[0].mxu0
        %v955 = vadd.f32 %v838, %v954
        %956 = vdwg.mxu0
        %v957 = vand.u32 %v521, 4294901760
        %958 = vmatprep.subr.mxu0 %v957
        %v959 = vand.u32 %v520, 4294901760
        %960 = vmatpush1.msra.mxu0 %v959
        %v961 = vand.u32 %v524, 4294901760
        %962 = vmatprep.subr.mxu0 %v961
        %v963 = vand.u32 %v523, 4294901760
        %964 = vmatpush1.msra.mxu0 %v963
        %v965 = vand.u32 %v527, 4294901760
        %966 = vmatprep.subr.mxu0 %v965
        %v967 = vand.u32 %v526, 4294901760
        %968 = vmatpush1.msra.mxu0 %v967
        %v969 = vand.u32 %v530, 4294901760
        %970 = vmatprep.subr.mxu0 %v969
        %v971 = vand.u32 %v529, 4294901760
        %972 = vmatpush1.msra.mxu0 %v971
        %v973 = vand.u32 %v573, 4294901760
        %974 = vmatprep.subr.mxu0 %v973
        %v975 = vand.u32 %v570, 4294901760
        %976 = vmatpush1.msra.mxu0 %v975
        %977 = vmatprep.subr.mxu0 0.0
        %978 = vmatpush1.msra.mxu0 0.0
        %979 = vmatprep.subr.mxu0 0.0
        %980 = vmatpush1.msra.mxu0 0.0
        %981 = vmatprep.subr.mxu0 0.0
        %982 = vmatpush1.msra.mxu0 0.0
        %983 = vmatprep.subr.mxu0 0.0
        %984 = vmatpush1.msra.mxu0 0.0
        %985 = vmatprep.subr.mxu0 0.0
        %986 = vmatpush1.msra.mxu0 0.0
        %987 = vmatprep.subr.mxu0 0.0
        %988 = vmatpush1.msra.mxu0 0.0
        %989 = vmatprep.subr.mxu0 0.0
        %990 = vmatpush1.msra.mxu0 0.0
        %991 = vmatprep.subr.mxu0 0.0
        %992 = vmatpush1.msra.mxu0 0.0
        %993 = vmatprep.subr.mxu0 0.0
        %994 = vmatpush1.msra.mxu0 0.0
        %995 = vmatprep.subr.mxu0 0.0
        %996 = vmatpush1.msra.mxu0 0.0
        %997 = vmatprep.subr.mxu0 0.0
        %998 = vmatpush1.msra.mxu0 0.0
        %999 = vmatprep.subr.mxu0 0.0
        %1000 = vmatpush1.msra.mxu0 0.0
        %1001 = vmatprep.subr.mxu0 0.0
        %1002 = vmatpush1.msra.mxu0 0.0
        %1003 = vmatprep.subr.mxu0 0.0
        %1004 = vmatpush1.msra.mxu0 0.0
        %1005 = vmatprep.subr.mxu0 0.0
        %1006 = vmatpush1.msra.mxu0 0.0
        %1007 = vmatprep.subr.mxu0 0.0
        %1008 = vmatpush1.msra.mxu0 0.0
        %1009 = vmatprep.subr.mxu0 0.0
        %1010 = vmatpush1.msra.mxu0 0.0
        %1011 = vmatprep.subr.mxu0 0.0
        %1012 = vmatpush1.msra.mxu0 0.0
        %1013 = vmatprep.subr.mxu0 0.0
        %1014 = vmatpush1.msra.mxu0 0.0
        %1015 = vmatprep.subr.mxu0 0.0
        %1016 = vmatpush1.msra.mxu0 0.0
        %1017 = vmatprep.subr.mxu0 0.0
        %1018 = vmatpush1.msra.mxu0 0.0
        %1019 = vmatprep.subr.mxu0 0.0
        %1020 = vmatpush1.msra.mxu0 0.0
        %1021 = vmatprep.subr.mxu0 0.0
        %1022 = vmatpush1.msra.mxu0 0.0
        %1023 = vmatprep.subr.mxu0 0.0
        %1024 = vmatpush1.msra.mxu0 0.0
        %1025 = vmatprep.subr.mxu0 0.0
        %1026 = vmatpush1.msra.mxu0 0.0
        %1027 = vmatprep.subr.mxu0 0.0
        %1028 = vmatpush1.msra.mxu0 0.0
        %1029 = vmatprep.subr.mxu0 0.0
        %1030 = vmatpush1.msra.mxu0 0.0
        %1031 = vmatprep.mubr.f32.mxu0 0.0
        %v1032 = vand.u32 %v557, 4294901760
        %v1033 = vsub.f32 %v557, %v1032
        %v1034 = vand.u32 %v1033, 4294901760
        %1035 = vmatmul.mubr.f32.gmra.mrb[0].mxu0 %v1034
        %v1036 = vpop.f32.mrb[0].mxu0
        %v1037 = vadd.f32 %v929, %v1036
        %v1038 = vpop.f32.mrb[0].mxu0
        %v1039 = vadd.f32 %v931, %v1038
        %1040 = vmatprep.mubr.f32.mxu0 0.0
        %v1041 = vand.u32 %v560, 4294901760
        %v1042 = vsub.f32 %v560, %v1041
        %v1043 = vand.u32 %v1042, 4294901760
        %1044 = vmatmul.mubr.f32.gmra.mrb[0].mxu0 %v1043
        %v1045 = vpop.f32.mrb[0].mxu0
        %v1046 = vadd.f32 %v937, %v1045
        %v1047 = vpop.f32.mrb[0].mxu0
        %v1048 = vadd.f32 %v939, %v1047
        %1049 = vmatprep.mubr.f32.mxu0 0.0
        %v1050 = vand.u32 %v563, 4294901760
        %v1051 = vsub.f32 %v563, %v1050
        %v1052 = vand.u32 %v1051, 4294901760
        %1053 = vmatmul.mubr.f32.gmra.mrb[0].mxu0 %v1052
        %v1054 = vpop.f32.mrb[0].mxu0
        %v1055 = vadd.f32 %v945, %v1054
        %v1056 = vpop.f32.mrb[0].mxu0
        %v1057 = vadd.f32 %v947, %v1056
        %1058 = vmatprep.mubr.f32.mxu0 0.0
        %v1059 = vand.u32 %v566, 4294901760
        %v1060 = vsub.f32 %v566, %v1059
        %v1061 = vand.u32 %v1060, 4294901760
        %1062 = vmatmul.mubr.f32.gmra.mrb[0].mxu0 %v1061
        %v1063 = vpop.f32.mrb[0].mxu0
        %v1064 = vadd.f32 %v953, %v1063
        %v1065 = vpop.f32.mrb[0].mxu0
        %v1066 = vadd.f32 %v955, %v1065
        %1067 = vdwg.mxu0
        %v1068 = vand.u32 %v521, 4294901760
        %v1069 = vsub.f32 %v521, %v1068
        %v1070 = vand.u32 %v1069, 4294901760
        %1071 = vmatprep.subr.mxu0 %v1070
        %v1072 = vand.u32 %v520, 4294901760
        %v1073 = vsub.f32 %v520, %v1072
        %v1074 = vand.u32 %v1073, 4294901760
        %1075 = vmatpush1.msra.mxu0 %v1074
        %v1076 = vand.u32 %v524, 4294901760
        %v1077 = vsub.f32 %v524, %v1076
        %v1078 = vand.u32 %v1077, 4294901760
        %1079 = vmatprep.subr.mxu0 %v1078
        %v1080 = vand.u32 %v523, 4294901760
        %v1081 = vsub.f32 %v523, %v1080
        %v1082 = vand.u32 %v1081, 4294901760
        %1083 = vmatpush1.msra.mxu0 %v1082
        %v1084 = vand.u32 %v527, 4294901760
        %v1085 = vsub.f32 %v527, %v1084
        %v1086 = vand.u32 %v1085, 4294901760
        %1087 = vmatprep.subr.mxu0 %v1086
        %v1088 = vand.u32 %v526, 4294901760
        %v1089 = vsub.f32 %v526, %v1088
        %v1090 = vand.u32 %v1089, 4294901760
        %1091 = vmatpush1.msra.mxu0 %v1090
        %v1092 = vand.u32 %v530, 4294901760
        %v1093 = vsub.f32 %v530, %v1092
        %v1094 = vand.u32 %v1093, 4294901760
        %1095 = vmatprep.subr.mxu0 %v1094
        %v1096 = vand.u32 %v529, 4294901760
        %v1097 = vsub.f32 %v529, %v1096
        %v1098 = vand.u32 %v1097, 4294901760
        %1099 = vmatpush1.msra.mxu0 %v1098
        %v1100 = vand.u32 %v573, 4294901760
        %v1101 = vsub.f32 %v573, %v1100
        %v1102 = vand.u32 %v1101, 4294901760
        %1103 = vmatprep.subr.mxu0 %v1102
        %v1104 = vand.u32 %v570, 4294901760
        %v1105 = vsub.f32 %v570, %v1104
        %v1106 = vand.u32 %v1105, 4294901760
        %1107 = vmatpush1.msra.mxu0 %v1106
        %1108 = vmatprep.subr.mxu0 0.0
        %1109 = vmatpush1.msra.mxu0 0.0
        %1110 = vmatprep.subr.mxu0 0.0
        %1111 = vmatpush1.msra.mxu0 0.0
        %1112 = vmatprep.subr.mxu0 0.0
        %1113 = vmatpush1.msra.mxu0 0.0
        %1114 = vmatprep.subr.mxu0 0.0
        %1115 = vmatpush1.msra.mxu0 0.0
        %1116 = vmatprep.subr.mxu0 0.0
        %1117 = vmatpush1.msra.mxu0 0.0
        %1118 = vmatprep.subr.mxu0 0.0
        %1119 = vmatpush1.msra.mxu0 0.0
        %1120 = vmatprep.subr.mxu0 0.0
        %1121 = vmatpush1.msra.mxu0 0.0
        %1122 = vmatprep.subr.mxu0 0.0
        %1123 = vmatpush1.msra.mxu0 0.0
        %1124 = vmatprep.subr.mxu0 0.0
        %1125 = vmatpush1.msra.mxu0 0.0
        %1126 = vmatprep.subr.mxu0 0.0
        %1127 = vmatpush1.msra.mxu0 0.0
        %1128 = vmatprep.subr.mxu0 0.0
        %1129 = vmatpush1.msra.mxu0 0.0
        %1130 = vmatprep.subr.mxu0 0.0
        %1131 = vmatpush1.msra.mxu0 0.0
        %1132 = vmatprep.subr.mxu0 0.0
        %1133 = vmatpush1.msra.mxu0 0.0
        %1134 = vmatprep.subr.mxu0 0.0
        %1135 = vmatpush1.msra.mxu0 0.0
        %1136 = vmatprep.subr.mxu0 0.0
        %1137 = vmatpush1.msra.mxu0 0.0
        %1138 = vmatprep.subr.mxu0 0.0
        %1139 = vmatpush1.msra.mxu0 0.0
        %1140 = vmatprep.subr.mxu0 0.0
        %1141 = vmatpush1.msra.mxu0 0.0
        %1142 = vmatprep.subr.mxu0 0.0
        %1143 = vmatpush1.msra.mxu0 0.0
        %1144 = vmatprep.subr.mxu0 0.0
        %1145 = vmatpush1.msra.mxu0 0.0
        %1146 = vmatprep.subr.mxu0 0.0
        %1147 = vmatpush1.msra.mxu0 0.0
        %1148 = vmatprep.subr.mxu0 0.0
        %1149 = vmatpush1.msra.mxu0 0.0
        %1150 = vmatprep.subr.mxu0 0.0
        %1151 = vmatpush1.msra.mxu0 0.0
        %1152 = vmatprep.subr.mxu0 0.0
        %1153 = vmatpush1.msra.mxu0 0.0
        %1154 = vmatprep.subr.mxu0 0.0
        %1155 = vmatpush1.msra.mxu0 0.0
        %1156 = vmatprep.subr.mxu0 0.0
        %1157 = vmatpush1.msra.mxu0 0.0
        %1158 = vmatprep.subr.mxu0 0.0
        %1159 = vmatpush1.msra.mxu0 0.0
        %1160 = vmatprep.subr.mxu0 0.0
        %1161 = vmatpush1.msra.mxu0 0.0
        %1162 = vmatprep.mubr.f32.mxu0 0.0
        %v1163 = vand.u32 %v557, 4294901760
        %1164 = vmatmul.mubr.f32.gmra.mrb[0].mxu0 %v1163
        %v1165 = vpop.f32.mrb[0].mxu0
        %v1166 = vadd.f32 %v1037, %v1165
        %v1167 = vpop.f32.mrb[0].mxu0
        %v1168 = vadd.f32 %v1039, %v1167
        %1169 = vmatprep.mubr.f32.mxu0 0.0
        %v1170 = vand.u32 %v560, 4294901760
        %1171 = vmatmul.mubr.f32.gmra.mrb[0].mxu0 %v1170
        %v1172 = vpop.f32.mrb[0].mxu0
        %v1173 = vadd.f32 %v1046, %v1172
        %v1174 = vpop.f32.mrb[0].mxu0
        %v1175 = vadd.f32 %v1048, %v1174
        %1176 = vmatprep.mubr.f32.mxu0 0.0
        %v1177 = vand.u32 %v563, 4294901760
        %1178 = vmatmul.mubr.f32.gmra.mrb[0].mxu0 %v1177
        %v1179 = vpop.f32.mrb[0].mxu0
        %v1180 = vadd.f32 %v1055, %v1179
        %v1181 = vpop.f32.mrb[0].mxu0
        %v1182 = vadd.f32 %v1057, %v1181
        %1183 = vmatprep.mubr.f32.mxu0 0.0
        %v1184 = vand.u32 %v566, 4294901760
        %1185 = vmatmul.mubr.f32.gmra.mrb[0].mxu0 %v1184
        %v1186 = vpop.f32.mrb[0].mxu0
        %v1187 = vadd.f32 %v1064, %v1186
        %v1188 = vpop.f32.mrb[0].mxu0
        %v1189 = vadd.f32 %v1066, %v1188
        %1190 = vdwg.mxu0
        %v1191 = vand.u32 %v521, 4294901760
        %1192 = vmatprep.subr.mxu0 %v1191
        %v1193 = vand.u32 %v520, 4294901760
        %1194 = vmatpush1.msra.mxu0 %v1193
        %v1195 = vand.u32 %v524, 4294901760
        %1196 = vmatprep.subr.mxu0 %v1195
        %v1197 = vand.u32 %v523, 4294901760
        %1198 = vmatpush1.msra.mxu0 %v1197
        %v1199 = vand.u32 %v527, 4294901760
        %1200 = vmatprep.subr.mxu0 %v1199
        %v1201 = vand.u32 %v526, 4294901760
        %1202 = vmatpush1.msra.mxu0 %v1201
        %v1203 = vand.u32 %v530, 4294901760
        %1204 = vmatprep.subr.mxu0 %v1203
        %v1205 = vand.u32 %v529, 4294901760
        %1206 = vmatpush1.msra.mxu0 %v1205
        %v1207 = vand.u32 %v573, 4294901760
        %1208 = vmatprep.subr.mxu0 %v1207
        %v1209 = vand.u32 %v570, 4294901760
        %1210 = vmatpush1.msra.mxu0 %v1209
        %1211 = vmatprep.subr.mxu0 0.0
        %1212 = vmatpush1.msra.mxu0 0.0
        %1213 = vmatprep.subr.mxu0 0.0
        %1214 = vmatpush1.msra.mxu0 0.0
        %1215 = vmatprep.subr.mxu0 0.0
        %1216 = vmatpush1.msra.mxu0 0.0
        %1217 = vmatprep.subr.mxu0 0.0
        %1218 = vmatpush1.msra.mxu0 0.0
        %1219 = vmatprep.subr.mxu0 0.0
        %1220 = vmatpush1.msra.mxu0 0.0
        %1221 = vmatprep.subr.mxu0 0.0
        %1222 = vmatpush1.msra.mxu0 0.0
        %1223 = vmatprep.subr.mxu0 0.0
        %1224 = vmatpush1.msra.mxu0 0.0
        %1225 = vmatprep.subr.mxu0 0.0
        %1226 = vmatpush1.msra.mxu0 0.0
        %1227 = vmatprep.subr.mxu0 0.0
        %1228 = vmatpush1.msra.mxu0 0.0
        %1229 = vmatprep.subr.mxu0 0.0
        %1230 = vmatpush1.msra.mxu0 0.0
        %1231 = vmatprep.subr.mxu0 0.0
        %1232 = vmatpush1.msra.mxu0 0.0
        %1233 = vmatprep.subr.mxu0 0.0
        %1234 = vmatpush1.msra.mxu0 0.0
        %1235 = vmatprep.subr.mxu0 0.0
        %1236 = vmatpush1.msra.mxu0 0.0
        %1237 = vmatprep.subr.mxu0 0.0
        %1238 = vmatpush1.msra.mxu0 0.0
        %1239 = vmatprep.subr.mxu0 0.0
        %1240 = vmatpush1.msra.mxu0 0.0
        %1241 = vmatprep.subr.mxu0 0.0
        %1242 = vmatpush1.msra.mxu0 0.0
        %1243 = vmatprep.subr.mxu0 0.0
        %1244 = vmatpush1.msra.mxu0 0.0
        %1245 = vmatprep.subr.mxu0 0.0
        %1246 = vmatpush1.msra.mxu0 0.0
        %1247 = vmatprep.subr.mxu0 0.0
        %1248 = vmatpush1.msra.mxu0 0.0
        %1249 = vmatprep.subr.mxu0 0.0
        %1250 = vmatpush1.msra.mxu0 0.0
        %1251 = vmatprep.subr.mxu0 0.0
        %1252 = vmatpush1.msra.mxu0 0.0
        %1253 = vmatprep.subr.mxu0 0.0
        %1254 = vmatpush1.msra.mxu0 0.0
        %1255 = vmatprep.subr.mxu0 0.0
        %1256 = vmatpush1.msra.mxu0 0.0
        %1257 = vmatprep.subr.mxu0 0.0
        %1258 = vmatpush1.msra.mxu0 0.0
        %1259 = vmatprep.subr.mxu0 0.0
        %1260 = vmatpush1.msra.mxu0 0.0
        %1261 = vmatprep.subr.mxu0 0.0
        %1262 = vmatpush1.msra.mxu0 0.0
        %1263 = vmatprep.subr.mxu0 0.0
        %1264 = vmatpush1.msra.mxu0 0.0
        %1265 = vmatprep.mubr.f32.mxu0 0.0
        %v1266 = vand.u32 %v557, 4294901760
        %1267 = vmatmul.mubr.f32.gmra.mrb[0].mxu0 %v1266
        %v1268 = vpop.f32.mrb[0].mxu0
        %v1269 = vadd.f32 %v1166, %v1268
        %v1270 = vpop.f32.mrb[0].mxu0
        %v1271 = vadd.f32 %v1168, %v1270
        %1272 = vmatprep.mubr.f32.mxu0 0.0
        %v1273 = vand.u32 %v560, 4294901760
        %1274 = vmatmul.mubr.f32.gmra.mrb[0].mxu0 %v1273
        %v1275 = vpop.f32.mrb[0].mxu0
        %v1276 = vadd.f32 %v1173, %v1275
        %v1277 = vpop.f32.mrb[0].mxu0
        %v1278 = vadd.f32 %v1175, %v1277
        %1279 = vmatprep.mubr.f32.mxu0 0.0
        %v1280 = vand.u32 %v563, 4294901760
        %1281 = vmatmul.mubr.f32.gmra.mrb[0].mxu0 %v1280
        %v1282 = vpop.f32.mrb[0].mxu0
        %v1283 = vadd.f32 %v1180, %v1282
        %v1284 = vpop.f32.mrb[0].mxu0
        %v1285 = vadd.f32 %v1182, %v1284
        %1286 = vmatprep.mubr.f32.mxu0 0.0
        %v1287 = vand.u32 %v566, 4294901760
        %1288 = vmatmul.mubr.f32.gmra.mrb[0].mxu0 %v1287
        %v1289 = vpop.f32.mrb[0].mxu0
        %v1290 = vadd.f32 %v1187, %v1289
        %v1291 = vpop.f32.mrb[0].mxu0
        %v1292 = vadd.f32 %v1189, %v1291
        %1293 = vdwg.mxu0
        %1294 = vmatprep.subr.mxu0 0.0
        %v1295 = vand.u32 %v522, 4294901760
        %1296 = vmatpush1.msra.mxu0 %v1295
        %1297 = vmatprep.subr.mxu0 0.0
        %v1298 = vand.u32 %v525, 4294901760
        %1299 = vmatpush1.msra.mxu0 %v1298
        %1300 = vmatprep.subr.mxu0 0.0
        %v1301 = vand.u32 %v528, 4294901760
        %1302 = vmatpush1.msra.mxu0 %v1301
        %1303 = vmatprep.subr.mxu0 0.0
        %v1304 = vand.u32 %v531, 4294901760
        %1305 = vmatpush1.msra.mxu0 %v1304
        %1306 = vmatprep.subr.mxu0 0.0
        %v1307 = vand.u32 %v576, 4294901760
        %1308 = vmatpush1.msra.mxu0 %v1307
        %1309 = vmatprep.subr.mxu0 0.0
        %1310 = vmatpush1.msra.mxu0 0.0
        %1311 = vmatprep.subr.mxu0 0.0
        %1312 = vmatpush1.msra.mxu0 0.0
        %1313 = vmatprep.subr.mxu0 0.0
        %1314 = vmatpush1.msra.mxu0 0.0
        %1315 = vmatprep.subr.mxu0 0.0
        %1316 = vmatpush1.msra.mxu0 0.0
        %1317 = vmatprep.subr.mxu0 0.0
        %1318 = vmatpush1.msra.mxu0 0.0
        %1319 = vmatprep.subr.mxu0 0.0
        %1320 = vmatpush1.msra.mxu0 0.0
        %1321 = vmatprep.subr.mxu0 0.0
        %1322 = vmatpush1.msra.mxu0 0.0
        %1323 = vmatprep.subr.mxu0 0.0
        %1324 = vmatpush1.msra.mxu0 0.0
        %1325 = vmatprep.subr.mxu0 0.0
        %1326 = vmatpush1.msra.mxu0 0.0
        %1327 = vmatprep.subr.mxu0 0.0
        %1328 = vmatpush1.msra.mxu0 0.0
        %1329 = vmatprep.subr.mxu0 0.0
        %1330 = vmatpush1.msra.mxu0 0.0
        %1331 = vmatprep.subr.mxu0 0.0
        %1332 = vmatpush1.msra.mxu0 0.0
        %1333 = vmatprep.subr.mxu0 0.0
        %1334 = vmatpush1.msra.mxu0 0.0
        %1335 = vmatprep.subr.mxu0 0.0
        %1336 = vmatpush1.msra.mxu0 0.0
        %1337 = vmatprep.subr.mxu0 0.0
        %1338 = vmatpush1.msra.mxu0 0.0
        %1339 = vmatprep.subr.mxu0 0.0
        %1340 = vmatpush1.msra.mxu0 0.0
        %1341 = vmatprep.subr.mxu0 0.0
        %1342 = vmatpush1.msra.mxu0 0.0
        %1343 = vmatprep.subr.mxu0 0.0
        %1344 = vmatpush1.msra.mxu0 0.0
        %1345 = vmatprep.subr.mxu0 0.0
        %1346 = vmatpush1.msra.mxu0 0.0
        %1347 = vmatprep.subr.mxu0 0.0
        %1348 = vmatpush1.msra.mxu0 0.0
        %1349 = vmatprep.subr.mxu0 0.0
        %1350 = vmatpush1.msra.mxu0 0.0
        %1351 = vmatprep.subr.mxu0 0.0
        %1352 = vmatpush1.msra.mxu0 0.0
        %1353 = vmatprep.subr.mxu0 0.0
        %1354 = vmatpush1.msra.mxu0 0.0
        %1355 = vmatprep.subr.mxu0 0.0
        %1356 = vmatpush1.msra.mxu0 0.0
        %1357 = vmatprep.subr.mxu0 0.0
        %1358 = vmatpush1.msra.mxu0 0.0
        %1359 = vmatprep.subr.mxu0 0.0
        %1360 = vmatpush1.msra.mxu0 0.0
        %1361 = vmatprep.subr.mxu0 0.0
        %1362 = vmatpush1.msra.mxu0 0.0
        %1363 = vmatprep.mubr.f32.mxu0 0.0
        %v1364 = vand.u32 %v557, 4294901760
        %v1365 = vsub.f32 %v557, %v1364
        %v1366 = vand.u32 %v1365, 4294901760
        %v1367 = vsub.f32 %v1365, %v1366
        %v1368 = vand.u32 %v1367, 4294901760
        %1369 = vmatmul.mubr.f32.gmra.mrb[0].mxu0 %v1368
        %v1370 = vpop.f32.mrb[0].mxu0
        %v1371 = vadd.f32 %v538, %v1370
        %v1372 = vpop.f32.mrb[0].mxu0
        %1373 = vmatprep.mubr.f32.mxu0 0.0
        %v1374 = vand.u32 %v560, 4294901760
        %v1375 = vsub.f32 %v560, %v1374
        %v1376 = vand.u32 %v1375, 4294901760
        %v1377 = vsub.f32 %v1375, %v1376
        %v1378 = vand.u32 %v1377, 4294901760
        %1379 = vmatmul.mubr.f32.gmra.mrb[0].mxu0 %v1378
        %v1380 = vpop.f32.mrb[0].mxu0
        %v1381 = vadd.f32 %v543, %v1380
        %v1382 = vpop.f32.mrb[0].mxu0
        %1383 = vmatprep.mubr.f32.mxu0 0.0
        %v1384 = vand.u32 %v563, 4294901760
        %v1385 = vsub.f32 %v563, %v1384
        %v1386 = vand.u32 %v1385, 4294901760
        %v1387 = vsub.f32 %v1385, %v1386
        %v1388 = vand.u32 %v1387, 4294901760
        %1389 = vmatmul.mubr.f32.gmra.mrb[0].mxu0 %v1388
        %v1390 = vpop.f32.mrb[0].mxu0
        %v1391 = vadd.f32 %v548, %v1390
        %v1392 = vpop.f32.mrb[0].mxu0
        %1393 = vmatprep.mubr.f32.mxu0 0.0
        %v1394 = vand.u32 %v566, 4294901760
        %v1395 = vsub.f32 %v566, %v1394
        %v1396 = vand.u32 %v1395, 4294901760
        %v1397 = vsub.f32 %v1395, %v1396
        %v1398 = vand.u32 %v1397, 4294901760
        %1399 = vmatmul.mubr.f32.gmra.mrb[0].mxu0 %v1398
        %v1400 = vpop.f32.mrb[0].mxu0
        %v1401 = vadd.f32 %v553, %v1400
        %v1402 = vpop.f32.mrb[0].mxu0
        %1403 = vdwg.mxu0
        %1404 = vmatprep.subr.mxu0 0.0
        %v1405 = vand.u32 %v522, 4294901760
        %v1406 = vsub.f32 %v522, %v1405
        %v1407 = vand.u32 %v1406, 4294901760
        %v1408 = vsub.f32 %v1406, %v1407
        %v1409 = vand.u32 %v1408, 4294901760
        %1410 = vmatpush1.msra.mxu0 %v1409
        %1411 = vmatprep.subr.mxu0 0.0
        %v1412 = vand.u32 %v525, 4294901760
        %v1413 = vsub.f32 %v525, %v1412
        %v1414 = vand.u32 %v1413, 4294901760
        %v1415 = vsub.f32 %v1413, %v1414
        %v1416 = vand.u32 %v1415, 4294901760
        %1417 = vmatpush1.msra.mxu0 %v1416
        %1418 = vmatprep.subr.mxu0 0.0
        %v1419 = vand.u32 %v528, 4294901760
        %v1420 = vsub.f32 %v528, %v1419
        %v1421 = vand.u32 %v1420, 4294901760
        %v1422 = vsub.f32 %v1420, %v1421
        %v1423 = vand.u32 %v1422, 4294901760
        %1424 = vmatpush1.msra.mxu0 %v1423
        %1425 = vmatprep.subr.mxu0 0.0
        %v1426 = vand.u32 %v531, 4294901760
        %v1427 = vsub.f32 %v531, %v1426
        %v1428 = vand.u32 %v1427, 4294901760
        %v1429 = vsub.f32 %v1427, %v1428
        %v1430 = vand.u32 %v1429, 4294901760
        %1431 = vmatpush1.msra.mxu0 %v1430
        %1432 = vmatprep.subr.mxu0 0.0
        %v1433 = vand.u32 %v576, 4294901760
        %v1434 = vsub.f32 %v576, %v1433
        %v1435 = vand.u32 %v1434, 4294901760
        %v1436 = vsub.f32 %v1434, %v1435
        %v1437 = vand.u32 %v1436, 4294901760
        %1438 = vmatpush1.msra.mxu0 %v1437
        %1439 = vmatprep.subr.mxu0 0.0
        %1440 = vmatpush1.msra.mxu0 0.0
        %1441 = vmatprep.subr.mxu0 0.0
        %1442 = vmatpush1.msra.mxu0 0.0
        %1443 = vmatprep.subr.mxu0 0.0
        %1444 = vmatpush1.msra.mxu0 0.0
        %1445 = vmatprep.subr.mxu0 0.0
        %1446 = vmatpush1.msra.mxu0 0.0
        %1447 = vmatprep.subr.mxu0 0.0
        %1448 = vmatpush1.msra.mxu0 0.0
        %1449 = vmatprep.subr.mxu0 0.0
        %1450 = vmatpush1.msra.mxu0 0.0
        %1451 = vmatprep.subr.mxu0 0.0
        %1452 = vmatpush1.msra.mxu0 0.0
        %1453 = vmatprep.subr.mxu0 0.0
        %1454 = vmatpush1.msra.mxu0 0.0
        %1455 = vmatprep.subr.mxu0 0.0
        %1456 = vmatpush1.msra.mxu0 0.0
        %1457 = vmatprep.subr.mxu0 0.0
        %1458 = vmatpush1.msra.mxu0 0.0
        %1459 = vmatprep.subr.mxu0 0.0
        %1460 = vmatpush1.msra.mxu0 0.0
        %1461 = vmatprep.subr.mxu0 0.0
        %1462 = vmatpush1.msra.mxu0 0.0
        %1463 = vmatprep.subr.mxu0 0.0
        %1464 = vmatpush1.msra.mxu0 0.0
        %1465 = vmatprep.subr.mxu0 0.0
        %1466 = vmatpush1.msra.mxu0 0.0
        %1467 = vmatprep.subr.mxu0 0.0
        %1468 = vmatpush1.msra.mxu0 0.0
        %1469 = vmatprep.subr.mxu0 0.0
        %1470 = vmatpush1.msra.mxu0 0.0
        %1471 = vmatprep.subr.mxu0 0.0
        %1472 = vmatpush1.msra.mxu0 0.0
        %1473 = vmatprep.subr.mxu0 0.0
        %1474 = vmatpush1.msra.mxu0 0.0
        %1475 = vmatprep.subr.mxu0 0.0
        %1476 = vmatpush1.msra.mxu0 0.0
        %1477 = vmatprep.subr.mxu0 0.0
        %1478 = vmatpush1.msra.mxu0 0.0
        %1479 = vmatprep.subr.mxu0 0.0
        %1480 = vmatpush1.msra.mxu0 0.0
        %1481 = vmatprep.subr.mxu0 0.0
        %1482 = vmatpush1.msra.mxu0 0.0
        %1483 = vmatprep.subr.mxu0 0.0
        %1484 = vmatpush1.msra.mxu0 0.0
        %1485 = vmatprep.subr.mxu0 0.0
        %1486 = vmatpush1.msra.mxu0 0.0
        %1487 = vmatprep.subr.mxu0 0.0
        %1488 = vmatpush1.msra.mxu0 0.0
        %1489 = vmatprep.subr.mxu0 0.0
        %1490 = vmatpush1.msra.mxu0 0.0
        %1491 = vmatprep.subr.mxu0 0.0
        %1492 = vmatpush1.msra.mxu0 0.0
        %1493 = vmatprep.mubr.f32.mxu0 0.0
        %v1494 = vand.u32 %v557, 4294901760
        %1495 = vmatmul.mubr.f32.gmra.mrb[0].mxu0 %v1494
        %v1496 = vpop.f32.mrb[0].mxu0
        %v1497 = vadd.f32 %v1371, %v1496
        %v1498 = vpop.f32.mrb[0].mxu0
        %1499 = vmatprep.mubr.f32.mxu0 0.0
        %v1500 = vand.u32 %v560, 4294901760
        %1501 = vmatmul.mubr.f32.gmra.mrb[0].mxu0 %v1500
        %v1502 = vpop.f32.mrb[0].mxu0
        %v1503 = vadd.f32 %v1381, %v1502
        %v1504 = vpop.f32.mrb[0].mxu0
        %1505 = vmatprep.mubr.f32.mxu0 0.0
        %v1506 = vand.u32 %v563, 4294901760
        %1507 = vmatmul.mubr.f32.gmra.mrb[0].mxu0 %v1506
        %v1508 = vpop.f32.mrb[0].mxu0
        %v1509 = vadd.f32 %v1391, %v1508
        %v1510 = vpop.f32.mrb[0].mxu0
        %1511 = vmatprep.mubr.f32.mxu0 0.0
        %v1512 = vand.u32 %v566, 4294901760
        %1513 = vmatmul.mubr.f32.gmra.mrb[0].mxu0 %v1512
        %v1514 = vpop.f32.mrb[0].mxu0
        %v1515 = vadd.f32 %v1401, %v1514
        %v1516 = vpop.f32.mrb[0].mxu0
        %1517 = vdwg.mxu0
        %1518 = vmatprep.subr.mxu0 0.0
        %v1519 = vand.u32 %v522, 4294901760
        %v1520 = vsub.f32 %v522, %v1519
        %1521 = vmatpush1.msra.mxu0 %v1520
        %1522 = vmatprep.subr.mxu0 0.0
        %v1523 = vand.u32 %v525, 4294901760
        %v1524 = vsub.f32 %v525, %v1523
        %1525 = vmatpush1.msra.mxu0 %v1524
        %1526 = vmatprep.subr.mxu0 0.0
        %v1527 = vand.u32 %v528, 4294901760
        %v1528 = vsub.f32 %v528, %v1527
        %1529 = vmatpush1.msra.mxu0 %v1528
        %1530 = vmatprep.subr.mxu0 0.0
        %v1531 = vand.u32 %v531, 4294901760
        %v1532 = vsub.f32 %v531, %v1531
        %1533 = vmatpush1.msra.mxu0 %v1532
        %1534 = vmatprep.subr.mxu0 0.0
        %v1535 = vand.u32 %v576, 4294901760
        %v1536 = vsub.f32 %v576, %v1535
        %1537 = vmatpush1.msra.mxu0 %v1536
        %1538 = vmatprep.subr.mxu0 0.0
        %1539 = vmatpush1.msra.mxu0 0.0
        %1540 = vmatprep.subr.mxu0 0.0
        %1541 = vmatpush1.msra.mxu0 0.0
        %1542 = vmatprep.subr.mxu0 0.0
        %1543 = vmatpush1.msra.mxu0 0.0
        %1544 = vmatprep.subr.mxu0 0.0
        %1545 = vmatpush1.msra.mxu0 0.0
        %1546 = vmatprep.subr.mxu0 0.0
        %1547 = vmatpush1.msra.mxu0 0.0
        %1548 = vmatprep.subr.mxu0 0.0
        %1549 = vmatpush1.msra.mxu0 0.0
        %1550 = vmatprep.subr.mxu0 0.0
        %1551 = vmatpush1.msra.mxu0 0.0
        %1552 = vmatprep.subr.mxu0 0.0
        %1553 = vmatpush1.msra.mxu0 0.0
        %1554 = vmatprep.subr.mxu0 0.0
        %1555 = vmatpush1.msra.mxu0 0.0
        %1556 = vmatprep.subr.mxu0 0.0
        %1557 = vmatpush1.msra.mxu0 0.0
        %1558 = vmatprep.subr.mxu0 0.0
        %1559 = vmatpush1.msra.mxu0 0.0
        %1560 = vmatprep.subr.mxu0 0.0
        %1561 = vmatpush1.msra.mxu0 0.0
        %1562 = vmatprep.subr.mxu0 0.0
        %1563 = vmatpush1.msra.mxu0 0.0
        %1564 = vmatprep.subr.mxu0 0.0
        %1565 = vmatpush1.msra.mxu0 0.0
        %1566 = vmatprep.subr.mxu0 0.0
        %1567 = vmatpush1.msra.mxu0 0.0
        %1568 = vmatprep.subr.mxu0 0.0
        %1569 = vmatpush1.msra.mxu0 0.0
        %1570 = vmatprep.subr.mxu0 0.0
        %1571 = vmatpush1.msra.mxu0 0.0
        %1572 = vmatprep.subr.mxu0 0.0
        %1573 = vmatpush1.msra.mxu0 0.0
        %1574 = vmatprep.subr.mxu0 0.0
        %1575 = vmatpush1.msra.mxu0 0.0
        %1576 = vmatprep.subr.mxu0 0.0
        %1577 = vmatpush1.msra.mxu0 0.0
        %1578 = vmatprep.subr.mxu0 0.0
        %1579 = vmatpush1.msra.mxu0 0.0
        %1580 = vmatprep.subr.mxu0 0.0
        %1581 = vmatpush1.msra.mxu0 0.0
        %1582 = vmatprep.subr.mxu0 0.0
        %1583 = vmatpush1.msra.mxu0 0.0
        %1584 = vmatprep.subr.mxu0 0.0
        %1585 = vmatpush1.msra.mxu0 0.0
        %1586 = vmatprep.subr.mxu0 0.0
        %1587 = vmatpush1.msra.mxu0 0.0
        %1588 = vmatprep.subr.mxu0 0.0
        %1589 = vmatpush1.msra.mxu0 0.0
        %1590 = vmatprep.subr.mxu0 0.0
        %1591 = vmatpush1.msra.mxu0 0.0
        %1592 = vmatprep.mubr.f32.mxu0 0.0
        %v1593 = vand.u32 %v557, 4294901760
        %v1594 = vsub.f32 %v557, %v1593
        %1595 = vmatmul.mubr.f32.gmra.mrb[0].mxu0 %v1594
        %v1596 = vpop.f32.mrb[0].mxu0
        %v1597 = vadd.f32 %v1497, %v1596
        %v1598 = vpop.f32.mrb[0].mxu0
        %1599 = vmatprep.mubr.f32.mxu0 0.0
        %v1600 = vand.u32 %v560, 4294901760
        %v1601 = vsub.f32 %v560, %v1600
        %1602 = vmatmul.mubr.f32.gmra.mrb[0].mxu0 %v1601
        %v1603 = vpop.f32.mrb[0].mxu0
        %v1604 = vadd.f32 %v1503, %v1603
        %v1605 = vpop.f32.mrb[0].mxu0
        %1606 = vmatprep.mubr.f32.mxu0 0.0
        %v1607 = vand.u32 %v563, 4294901760
        %v1608 = vsub.f32 %v563, %v1607
        %1609 = vmatmul.mubr.f32.gmra.mrb[0].mxu0 %v1608
        %v1610 = vpop.f32.mrb[0].mxu0
        %v1611 = vadd.f32 %v1509, %v1610
        %v1612 = vpop.f32.mrb[0].mxu0
        %1613 = vmatprep.mubr.f32.mxu0 0.0
        %v1614 = vand.u32 %v566, 4294901760
        %v1615 = vsub.f32 %v566, %v1614
        %1616 = vmatmul.mubr.f32.gmra.mrb[0].mxu0 %v1615
        %v1617 = vpop.f32.mrb[0].mxu0
        %v1618 = vadd.f32 %v1515, %v1617
        %v1619 = vpop.f32.mrb[0].mxu0
        %1620 = vdwg.mxu0
        %1621 = vmatprep.subr.mxu0 0.0
        %v1622 = vand.u32 %v522, 4294901760
        %1623 = vmatpush1.msra.mxu0 %v1622
        %1624 = vmatprep.subr.mxu0 0.0
        %v1625 = vand.u32 %v525, 4294901760
        %1626 = vmatpush1.msra.mxu0 %v1625
        %1627 = vmatprep.subr.mxu0 0.0
        %v1628 = vand.u32 %v528, 4294901760
        %1629 = vmatpush1.msra.mxu0 %v1628
        %1630 = vmatprep.subr.mxu0 0.0
        %v1631 = vand.u32 %v531, 4294901760
        %1632 = vmatpush1.msra.mxu0 %v1631
        %1633 = vmatprep.subr.mxu0 0.0
        %v1634 = vand.u32 %v576, 4294901760
        %1635 = vmatpush1.msra.mxu0 %v1634
        %1636 = vmatprep.subr.mxu0 0.0
        %1637 = vmatpush1.msra.mxu0 0.0
        %1638 = vmatprep.subr.mxu0 0.0
        %1639 = vmatpush1.msra.mxu0 0.0
        %1640 = vmatprep.subr.mxu0 0.0
        %1641 = vmatpush1.msra.mxu0 0.0
        %1642 = vmatprep.subr.mxu0 0.0
        %1643 = vmatpush1.msra.mxu0 0.0
        %1644 = vmatprep.subr.mxu0 0.0
        %1645 = vmatpush1.msra.mxu0 0.0
        %1646 = vmatprep.subr.mxu0 0.0
        %1647 = vmatpush1.msra.mxu0 0.0
        %1648 = vmatprep.subr.mxu0 0.0
        %1649 = vmatpush1.msra.mxu0 0.0
        %1650 = vmatprep.subr.mxu0 0.0
        %1651 = vmatpush1.msra.mxu0 0.0
        %1652 = vmatprep.subr.mxu0 0.0
        %1653 = vmatpush1.msra.mxu0 0.0
        %1654 = vmatprep.subr.mxu0 0.0
        %1655 = vmatpush1.msra.mxu0 0.0
        %1656 = vmatprep.subr.mxu0 0.0
        %1657 = vmatpush1.msra.mxu0 0.0
        %1658 = vmatprep.subr.mxu0 0.0
        %1659 = vmatpush1.msra.mxu0 0.0
        %1660 = vmatprep.subr.mxu0 0.0
        %1661 = vmatpush1.msra.mxu0 0.0
        %1662 = vmatprep.subr.mxu0 0.0
        %1663 = vmatpush1.msra.mxu0 0.0
        %1664 = vmatprep.subr.mxu0 0.0
        %1665 = vmatpush1.msra.mxu0 0.0
        %1666 = vmatprep.subr.mxu0 0.0
        %1667 = vmatpush1.msra.mxu0 0.0
        %1668 = vmatprep.subr.mxu0 0.0
        %1669 = vmatpush1.msra.mxu0 0.0
        %1670 = vmatprep.subr.mxu0 0.0
        %1671 = vmatpush1.msra.mxu0 0.0
        %1672 = vmatprep.subr.mxu0 0.0
        %1673 = vmatpush1.msra.mxu0 0.0
        %1674 = vmatprep.subr.mxu0 0.0
        %1675 = vmatpush1.msra.mxu0 0.0
        %1676 = vmatprep.subr.mxu0 0.0
        %1677 = vmatpush1.msra.mxu0 0.0
        %1678 = vmatprep.subr.mxu0 0.0
        %1679 = vmatpush1.msra.mxu0 0.0
        %1680 = vmatprep.subr.mxu0 0.0
        %1681 = vmatpush1.msra.mxu0 0.0
        %1682 = vmatprep.subr.mxu0 0.0
        %1683 = vmatpush1.msra.mxu0 0.0
        %1684 = vmatprep.subr.mxu0 0.0
        %1685 = vmatpush1.msra.mxu0 0.0
        %1686 = vmatprep.subr.mxu0 0.0
        %1687 = vmatpush1.msra.mxu0 0.0
        %1688 = vmatprep.subr.mxu0 0.0
        %1689 = vmatpush1.msra.mxu0 0.0
        %1690 = vmatprep.mubr.f32.mxu0 0.0
        %v1691 = vand.u32 %v557, 4294901760
        %v1692 = vsub.f32 %v557, %v1691
        %v1693 = vand.u32 %v1692, 4294901760
        %1694 = vmatmul.mubr.f32.gmra.mrb[0].mxu0 %v1693
        %v1695 = vpop.f32.mrb[0].mxu0
        %v1696 = vadd.f32 %v1597, %v1695
        %v1697 = vpop.f32.mrb[0].mxu0
        %1698 = vmatprep.mubr.f32.mxu0 0.0
        %v1699 = vand.u32 %v560, 4294901760
        %v1700 = vsub.f32 %v560, %v1699
        %v1701 = vand.u32 %v1700, 4294901760
        %1702 = vmatmul.mubr.f32.gmra.mrb[0].mxu0 %v1701
        %v1703 = vpop.f32.mrb[0].mxu0
        %v1704 = vadd.f32 %v1604, %v1703
        %v1705 = vpop.f32.mrb[0].mxu0
        %1706 = vmatprep.mubr.f32.mxu0 0.0
        %v1707 = vand.u32 %v563, 4294901760
        %v1708 = vsub.f32 %v563, %v1707
        %v1709 = vand.u32 %v1708, 4294901760
        %1710 = vmatmul.mubr.f32.gmra.mrb[0].mxu0 %v1709
        %v1711 = vpop.f32.mrb[0].mxu0
        %v1712 = vadd.f32 %v1611, %v1711
        %v1713 = vpop.f32.mrb[0].mxu0
        %1714 = vmatprep.mubr.f32.mxu0 0.0
        %v1715 = vand.u32 %v566, 4294901760
        %v1716 = vsub.f32 %v566, %v1715
        %v1717 = vand.u32 %v1716, 4294901760
        %1718 = vmatmul.mubr.f32.gmra.mrb[0].mxu0 %v1717
        %v1719 = vpop.f32.mrb[0].mxu0
        %v1720 = vadd.f32 %v1618, %v1719
        %v1721 = vpop.f32.mrb[0].mxu0
        %1722 = vdwg.mxu0
        %1723 = vmatprep.subr.mxu0 0.0
        %v1724 = vand.u32 %v522, 4294901760
        %v1725 = vsub.f32 %v522, %v1724
        %v1726 = vand.u32 %v1725, 4294901760
        %1727 = vmatpush1.msra.mxu0 %v1726
        %1728 = vmatprep.subr.mxu0 0.0
        %v1729 = vand.u32 %v525, 4294901760
        %v1730 = vsub.f32 %v525, %v1729
        %v1731 = vand.u32 %v1730, 4294901760
        %1732 = vmatpush1.msra.mxu0 %v1731
        %1733 = vmatprep.subr.mxu0 0.0
        %v1734 = vand.u32 %v528, 4294901760
        %v1735 = vsub.f32 %v528, %v1734
        %v1736 = vand.u32 %v1735, 4294901760
        %1737 = vmatpush1.msra.mxu0 %v1736
        %1738 = vmatprep.subr.mxu0 0.0
        %v1739 = vand.u32 %v531, 4294901760
        %v1740 = vsub.f32 %v531, %v1739
        %v1741 = vand.u32 %v1740, 4294901760
        %1742 = vmatpush1.msra.mxu0 %v1741
        %1743 = vmatprep.subr.mxu0 0.0
        %v1744 = vand.u32 %v576, 4294901760
        %v1745 = vsub.f32 %v576, %v1744
        %v1746 = vand.u32 %v1745, 4294901760
        %1747 = vmatpush1.msra.mxu0 %v1746
        %1748 = vmatprep.subr.mxu0 0.0
        %1749 = vmatpush1.msra.mxu0 0.0
        %1750 = vmatprep.subr.mxu0 0.0
        %1751 = vmatpush1.msra.mxu0 0.0
        %1752 = vmatprep.subr.mxu0 0.0
        %1753 = vmatpush1.msra.mxu0 0.0
        %1754 = vmatprep.subr.mxu0 0.0
        %1755 = vmatpush1.msra.mxu0 0.0
        %1756 = vmatprep.subr.mxu0 0.0
        %1757 = vmatpush1.msra.mxu0 0.0
        %1758 = vmatprep.subr.mxu0 0.0
        %1759 = vmatpush1.msra.mxu0 0.0
        %1760 = vmatprep.subr.mxu0 0.0
        %1761 = vmatpush1.msra.mxu0 0.0
        %1762 = vmatprep.subr.mxu0 0.0
        %1763 = vmatpush1.msra.mxu0 0.0
        %1764 = vmatprep.subr.mxu0 0.0
        %1765 = vmatpush1.msra.mxu0 0.0
        %1766 = vmatprep.subr.mxu0 0.0
        %1767 = vmatpush1.msra.mxu0 0.0
        %1768 = vmatprep.subr.mxu0 0.0
        %1769 = vmatpush1.msra.mxu0 0.0
        %1770 = vmatprep.subr.mxu0 0.0
        %1771 = vmatpush1.msra.mxu0 0.0
        %1772 = vmatprep.subr.mxu0 0.0
        %1773 = vmatpush1.msra.mxu0 0.0
        %1774 = vmatprep.subr.mxu0 0.0
        %1775 = vmatpush1.msra.mxu0 0.0
        %1776 = vmatprep.subr.mxu0 0.0
        %1777 = vmatpush1.msra.mxu0 0.0
        %1778 = vmatprep.subr.mxu0 0.0
        %1779 = vmatpush1.msra.mxu0 0.0
        %1780 = vmatprep.subr.mxu0 0.0
        %1781 = vmatpush1.msra.mxu0 0.0
        %1782 = vmatprep.subr.mxu0 0.0
        %1783 = vmatpush1.msra.mxu0 0.0
        %1784 = vmatprep.subr.mxu0 0.0
        %1785 = vmatpush1.msra.mxu0 0.0
        %1786 = vmatprep.subr.mxu0 0.0
        %1787 = vmatpush1.msra.mxu0 0.0
        %1788 = vmatprep.subr.mxu0 0.0
        %1789 = vmatpush1.msra.mxu0 0.0
        %1790 = vmatprep.subr.mxu0 0.0
        %1791 = vmatpush1.msra.mxu0 0.0
        %1792 = vmatprep.subr.mxu0 0.0
        %1793 = vmatpush1.msra.mxu0 0.0
        %1794 = vmatprep.subr.mxu0 0.0
        %1795 = vmatpush1.msra.mxu0 0.0
        %1796 = vmatprep.subr.mxu0 0.0
        %1797 = vmatpush1.msra.mxu0 0.0
        %1798 = vmatprep.subr.mxu0 0.0
        %1799 = vmatpush1.msra.mxu0 0.0
        %1800 = vmatprep.subr.mxu0 0.0
        %1801 = vmatpush1.msra.mxu0 0.0
        %1802 = vmatprep.mubr.f32.mxu0 0.0
        %v1803 = vand.u32 %v557, 4294901760
        %1804 = vmatmul.mubr.f32.gmra.mrb[0].mxu0 %v1803
        %v1805 = vpop.f32.mrb[0].mxu0
        %v1806 = vadd.f32 %v1696, %v1805
        %v1807 = vpop.f32.mrb[0].mxu0
        %1808 = vmatprep.mubr.f32.mxu0 0.0
        %v1809 = vand.u32 %v560, 4294901760
        %1810 = vmatmul.mubr.f32.gmra.mrb[0].mxu0 %v1809
        %v1811 = vpop.f32.mrb[0].mxu0
        %v1812 = vadd.f32 %v1704, %v1811
        %v1813 = vpop.f32.mrb[0].mxu0
        %1814 = vmatprep.mubr.f32.mxu0 0.0
        %v1815 = vand.u32 %v563, 4294901760
        %1816 = vmatmul.mubr.f32.gmra.mrb[0].mxu0 %v1815
        %v1817 = vpop.f32.mrb[0].mxu0
        %v1818 = vadd.f32 %v1712, %v1817
        %v1819 = vpop.f32.mrb[0].mxu0
        %1820 = vmatprep.mubr.f32.mxu0 0.0
        %v1821 = vand.u32 %v566, 4294901760
        %1822 = vmatmul.mubr.f32.gmra.mrb[0].mxu0 %v1821
        %v1823 = vpop.f32.mrb[0].mxu0
        %v1824 = vadd.f32 %v1720, %v1823
        %v1825 = vpop.f32.mrb[0].mxu0
        %1826 = vdwg.mxu0
        %1827 = vmatprep.subr.mxu0 0.0
        %v1828 = vand.u32 %v522, 4294901760
        %1829 = vmatpush1.msra.mxu0 %v1828
        %1830 = vmatprep.subr.mxu0 0.0
        %v1831 = vand.u32 %v525, 4294901760
        %1832 = vmatpush1.msra.mxu0 %v1831
        %1833 = vmatprep.subr.mxu0 0.0
        %v1834 = vand.u32 %v528, 4294901760
        %1835 = vmatpush1.msra.mxu0 %v1834
        %1836 = vmatprep.subr.mxu0 0.0
        %v1837 = vand.u32 %v531, 4294901760
        %1838 = vmatpush1.msra.mxu0 %v1837
        %1839 = vmatprep.subr.mxu0 0.0
        %v1840 = vand.u32 %v576, 4294901760
        %1841 = vmatpush1.msra.mxu0 %v1840
        %1842 = vmatprep.subr.mxu0 0.0
        %1843 = vmatpush1.msra.mxu0 0.0
        %1844 = vmatprep.subr.mxu0 0.0
        %1845 = vmatpush1.msra.mxu0 0.0
        %1846 = vmatprep.subr.mxu0 0.0
        %1847 = vmatpush1.msra.mxu0 0.0
        %1848 = vmatprep.subr.mxu0 0.0
        %1849 = vmatpush1.msra.mxu0 0.0
        %1850 = vmatprep.subr.mxu0 0.0
        %1851 = vmatpush1.msra.mxu0 0.0
        %1852 = vmatprep.subr.mxu0 0.0
        %1853 = vmatpush1.msra.mxu0 0.0
        %1854 = vmatprep.subr.mxu0 0.0
        %1855 = vmatpush1.msra.mxu0 0.0
        %1856 = vmatprep.subr.mxu0 0.0
        %1857 = vmatpush1.msra.mxu0 0.0
        %1858 = vmatprep.subr.mxu0 0.0
        %1859 = vmatpush1.msra.mxu0 0.0
        %1860 = vmatprep.subr.mxu0 0.0
        %1861 = vmatpush1.msra.mxu0 0.0
        %1862 = vmatprep.subr.mxu0 0.0
        %1863 = vmatpush1.msra.mxu0 0.0
        %1864 = vmatprep.subr.mxu0 0.0
        %1865 = vmatpush1.msra.mxu0 0.0
        %1866 = vmatprep.subr.mxu0 0.0
        %1867 = vmatpush1.msra.mxu0 0.0
        %1868 = vmatprep.subr.mxu0 0.0
        %1869 = vmatpush1.msra.mxu0 0.0
        %1870 = vmatprep.subr.mxu0 0.0
        %1871 = vmatpush1.msra.mxu0 0.0
        %1872 = vmatprep.subr.mxu0 0.0
        %1873 = vmatpush1.msra.mxu0 0.0
        %1874 = vmatprep.subr.mxu0 0.0
        %1875 = vmatpush1.msra.mxu0 0.0
        %1876 = vmatprep.subr.mxu0 0.0
        %1877 = vmatpush1.msra.mxu0 0.0
        %1878 = vmatprep.subr.mxu0 0.0
        %1879 = vmatpush1.msra.mxu0 0.0
        %1880 = vmatprep.subr.mxu0 0.0
        %1881 = vmatpush1.msra.mxu0 0.0
        %1882 = vmatprep.subr.mxu0 0.0
        %1883 = vmatpush1.msra.mxu0 0.0
        %1884 = vmatprep.subr.mxu0 0.0
        %1885 = vmatpush1.msra.mxu0 0.0
        %1886 = vmatprep.subr.mxu0 0.0
        %1887 = vmatpush1.msra.mxu0 0.0
        %1888 = vmatprep.subr.mxu0 0.0
        %1889 = vmatpush1.msra.mxu0 0.0
        %1890 = vmatprep.subr.mxu0 0.0
        %1891 = vmatpush1.msra.mxu0 0.0
        %1892 = vmatprep.subr.mxu0 0.0
        %1893 = vmatpush1.msra.mxu0 0.0
        %1894 = vmatprep.subr.mxu0 0.0
        %1895 = vmatpush1.msra.mxu0 0.0
        %1896 = vmatprep.mubr.f32.mxu0 0.0
        %v1897 = vand.u32 %v557, 4294901760
        %1898 = vmatmul.mubr.f32.gmra.mrb[0].mxu0 %v1897
        %v1899 = vpop.f32.mrb[0].mxu0
        %v1900 = vadd.f32 %v1806, %v1899
        %v1901 = vpop.f32.mrb[0].mxu0
        %1902 = vmatprep.mubr.f32.mxu0 0.0
        %v1903 = vand.u32 %v560, 4294901760
        %1904 = vmatmul.mubr.f32.gmra.mrb[0].mxu0 %v1903
        %v1905 = vpop.f32.mrb[0].mxu0
        %v1906 = vadd.f32 %v1812, %v1905
        %v1907 = vpop.f32.mrb[0].mxu0
        %1908 = vmatprep.mubr.f32.mxu0 0.0
        %v1909 = vand.u32 %v563, 4294901760
        %1910 = vmatmul.mubr.f32.gmra.mrb[0].mxu0 %v1909
        %v1911 = vpop.f32.mrb[0].mxu0
        %v1912 = vadd.f32 %v1818, %v1911
        %v1913 = vpop.f32.mrb[0].mxu0
        %1914 = vmatprep.mubr.f32.mxu0 0.0
        %v1915 = vand.u32 %v566, 4294901760
        %1916 = vmatmul.mubr.f32.gmra.mrb[0].mxu0 %v1915
        %v1917 = vpop.f32.mrb[0].mxu0
        %v1918 = vadd.f32 %v1824, %v1917
        %v1919 = vpop.f32.mrb[0].mxu0
        %1920 = vdwg.mxu0
        %v1921 = vmax.f32 %v1269, 0.0
        %v1922 = vmax.f32 %v1271, 0.0
        %v1923 = vmax.f32 %v1900, 0.0
        %v1924 = vmax.f32 %v1276, 0.0
        %v1925 = vmax.f32 %v1278, 0.0
        %v1926 = vmax.f32 %v1906, 0.0
        %v1927 = vmax.f32 %v1283, 0.0
        %v1928 = vmax.f32 %v1285, 0.0
        %v1929 = vmax.f32 %v1912, 0.0
        %v1930 = vmax.f32 %v1290, 0.0
        %v1931 = vmax.f32 %v1292, 0.0
        %v1932 = vmax.f32 %v1918, 0.0
        %v1933 = vmax.f32 %v1921, 1e-06
        %v1934 = vmax.f32 %v1922, 1e-06
        %v1935 = vmax.f32 %v1923, 1e-06
        %v1936 = vmax.f32 %v1924, 1e-06
        %v1937 = vmax.f32 %v1925, 1e-06
        %v1938 = vmax.f32 %v1926, 1e-06
        %v1939 = vmax.f32 %v1927, 1e-06
        %v1940 = vmax.f32 %v1928, 1e-06
        %v1941 = vmax.f32 %v1929, 1e-06
        %v1942 = vmax.f32 %v1930, 1e-06
        %v1943 = vmax.f32 %v1931, 1e-06
        %v1944 = vmax.f32 %v1932, 1e-06
        %v1945 = vmul.f32 %v1933, %v1933
        %v1946 = vmul.f32 %v1934, %v1934
        %v1947 = vmul.f32 %v1935, %v1935
        %v1948 = vmul.f32 %v1936, %v1936
        %v1949 = vmul.f32 %v1937, %v1937
        %v1950 = vmul.f32 %v1938, %v1938
        %v1951 = vmul.f32 %v1939, %v1939
        %v1952 = vmul.f32 %v1940, %v1940
        %v1953 = vmul.f32 %v1941, %v1941
        %v1954 = vmul.f32 %v1942, %v1942
        %v1955 = vmul.f32 %v1943, %v1943
        %v1956 = vmul.f32 %v1944, %v1944
        %v1957 = vmul.f32 %v1945, %v1933
        %v1958 = vmul.f32 %v1946, %v1934
        %v1959 = vmul.f32 %v1947, %v1935
        %v1960 = vmul.f32 %v1948, %v1936
        %v1961 = vmul.f32 %v1949, %v1937
        %v1962 = vmul.f32 %v1950, %v1938
        %v1963 = vmul.f32 %v1951, %v1939
        %v1964 = vmul.f32 %v1952, %v1940
        %v1965 = vmul.f32 %v1953, %v1941
        %v1966 = vmul.f32 %v1954, %v1942
        %v1967 = vmul.f32 %v1955, %v1943
        %v1968 = vmul.f32 %v1956, %v1944
        %v1969 = vld [vmem:[%s3] sm:$0x7]
        %v1971 = vlaneseq
        %v1972 = vshrl.u32 %v1971, 7
        %v1973 = vsub.s32 0, %v1972
        %v1974 = vrot.slane %v1969, %v1973
        %v1975 = vlaneseq
        %v1976 = vshrl.u32 %v1975, 7
        %v1977 = vsub.s32 1, %v1976
        %v1978 = vrot.slane %v1969, %v1977
        %v1979 = vlaneseq
        %v1980 = vshrl.u32 %v1979, 7
        %v1981 = vsub.s32 2, %v1980
        %v1982 = vrot.slane %v1969, %v1981
        %v1986 = vmul.f32 %v1957, %v1974
        %v1987 = vmul.f32 %v1958, %v1978
        %v1988 = vmul.f32 %v1959, %v1982
        %v1989 = vmul.f32 %v1960, %v1974
        %v1990 = vmul.f32 %v1961, %v1978
        %v1991 = vmul.f32 %v1962, %v1982
        %v1992 = vmul.f32 %v1963, %v1974
        %v1993 = vmul.f32 %v1964, %v1978
        %v1994 = vmul.f32 %v1965, %v1982
        %v1995 = vmul.f32 %v1966, %v1974
        %v1996 = vmul.f32 %v1967, %v1978
        %v1997 = vmul.f32 %v1968, %v1982
        %v1998 = vadd.f32 %v1986, %v1987
        %vm1999 = vcmask 261120
        %v2000 = vsel %vm1999, %v1988, 0.0
        %v2001 = vadd.f32 %v1998, %v2000
        %2002 = vadd.xlane.f32.xlu0 %v2001
        %v2003 = vpop.xlane.xlu0 %2002
        %v2004 = vadd.f32 %v1989, %v1990
        %v2005 = vsel %vm1999, %v1991, 0.0
        %v2006 = vadd.f32 %v2004, %v2005
        %2007 = vadd.xlane.f32.xlu0 %v2006
        %v2008 = vpop.xlane.xlu0 %2007
        %v2009 = vadd.f32 %v1992, %v1993
        %v2010 = vsel %vm1999, %v1994, 0.0
        %v2011 = vadd.f32 %v2009, %v2010
        %2012 = vadd.xlane.f32.xlu0 %v2011
        %v2013 = vpop.xlane.xlu0 %2012
        %v2014 = vadd.f32 %v1995, %v1996
        %v2015 = vsel %vm1999, %v1997, 0.0
        %v2016 = vadd.f32 %v2014, %v2015
        %2017 = vadd.xlane.f32.xlu0 %v2016
        %v2018 = vpop.xlane.xlu0 %2017
        %v2019 = vmul.f32 %v2003, 0.00390625
        %v2020 = vmul.f32 %v2008, 0.00390625
        %v2021 = vmul.f32 %v2013, 0.00390625
        %v2022 = vmul.f32 %v2018, 0.00390625
        %v2023 = vlog2.pop %v2019
        %v2024 = vmul.f32 %v2023, 0.6931472
        %v2025 = vlog2.pop %v2020
        %v2026 = vmul.f32 %v2025, 0.6931472
        %v2027 = vlog2.pop %v2021
        %v2028 = vmul.f32 %v2027, 0.6931472
        %v2029 = vlog2.pop %v2022
        %v2030 = vmul.f32 %v2029, 0.6931472
        %v2031 = vmul.f32 %v2024, 0.33333334
        %v2032 = vmul.f32 %v2026, 0.33333334
        %v2033 = vmul.f32 %v2028, 0.33333334
        %v2034 = vmul.f32 %v2030, 0.33333334
        %v2035 = vmul.f32 %v2031, 1.442695
        %v2036 = vpow.pop %v2035
        %v2037 = vmul.f32 %v2032, 1.442695
        %v2038 = vpow.pop %v2037
        %v2039 = vmul.f32 %v2033, 1.442695
        %v2040 = vpow.pop %v2039
        %v2041 = vmul.f32 %v2034, 1.442695
        %v2042 = vpow.pop %v2041
        %v2043 = vmul.f32 %v2036, %v2036
        %v2044 = vmul.f32 %v2038, %v2038
        %v2045 = vmul.f32 %v2040, %v2040
        %v2046 = vmul.f32 %v2042, %v2042
        %v2047 = vadd.f32 %v2043, %v2044
        %v2048 = vadd.f32 %v2047, %v2045
        %v2049 = vadd.f32 %v2048, %v2046
        %v2050 = vrot.slane %v2049, 4
        %v2051 = vadd.f32 %v2049, %v2050
        %v2052 = vrot.slane %v2051, 2
        %v2053 = vadd.f32 %v2051, %v2052
        %v2054 = vrot.slane %v2053, 1
        %v2055 = vadd.f32 %v2053, %v2054
        %v2056 = vrsqrt.pop %v2055
        %v2057 = vmul.f32 %v2055, %v2056
        %vm2058 = vcmp.eq.f32.partialorder %v2055, inf
        %v2059 = vsel %vm2058, %v2055, %v2057
        %vm2060 = vcmp.eq.f32.partialorder %v2055, 0.0
        %v2061 = vand.u32 %v2055, 2147483648
        %v2062 = vsel %vm2060, %v2061, %v2059
        %v2063 = vmax.f32 %v2062, 1e-12
        %v2064 = vrcp.pop %v2063
        %v2065 = vmul.f32 %v2036, %v2064
        %v2066 = vmul.f32 %v2038, %v2064
        %v2067 = vmul.f32 %v2040, %v2064
        %v2068 = vmul.f32 %v2042, %v2064
        %v2073 = vlaneseq
        %v2074 = vand.u32 %v2073, 127
        %v2075 = vlaneseq
        %v2076 = vshrl.u32 %v2075, 7
        %v2077 = vsub.s32 %v2074, %v2076
        %v2078 = vrot.slane %v2065, %v2077
        %v2079 = vadd.s32 %v2074, 4294967288
        %v2080 = vlaneseq
        %v2081 = vshrl.u32 %v2080, 7
        %v2082 = vsub.s32 %v2079, %v2081
        %v2083 = vrot.slane %v2066, %v2082
        %vm2084 = vcmask 130112
        %v2085 = vsel %vm2084, %v2083, %v2078
        %v2086 = vadd.s32 %v2074, 4294967280
        %v2087 = vlaneseq
        %v2088 = vshrl.u32 %v2087, 7
        %v2089 = vsub.s32 %v2086, %v2088
        %v2090 = vrot.slane %v2067, %v2089
        %vm2091 = vcmask 195712
        %v2092 = vsel %vm2091, %v2090, %v2085
        %v2093 = vadd.s32 %v2074, 4294967272
        %v2094 = vlaneseq
        %v2095 = vshrl.u32 %v2094, 7
        %v2096 = vsub.s32 %v2093, %v2095
        %v2097 = vrot.slane %v2068, %v2096
        %vm2098 = vcmask 261312
        %v2099 = vsel %vm2098, %v2097, %v2092
        %vm2101 = vcmask 253952
        %2102 = vst.msk [vmem:[%s212] sm:$0x1] %vm2101, %v2099
        %s2103 = sand.u32 %s118, 1
        %s2104 = scalar_lea.sflag [#allocation6], %s2103
        %s2105 = sand.u32 %s118, 1
        %s2106 = scalar_lea.vmem [#allocation7], %s2105
        // Predicated region
        $region41: #{tpu_custom_call.1} parent=35 // pred_check
          %p2107 = pneg %p128
        $region42: #{tpu_custom_call.1} parent=35 // pred_check_branch
          %2109 = sbr.rel (%p2107) target = $region44
        $region43: #{tpu_custom_call.1} parent=35 // pred_region
          %s2111 = ssub.s32 16, 16
          %2112 = vsyncadd %s2104, %s2111
          %s2113 = smul.addr %s21, 16
          %s2114 = scalar_lea.hbm %s4, %s2113
          %s2116 = sshll.u32 %s2106, 4
          %s2117 = int_to_ptr.vmem [resolvable:$true] %s2116
          %2119 = dma.vmem_to_hbm [thread:$0]  %s2117, 16, %s2114, %s2104
        $region44: #{tpu_custom_call.1} parent=35 // pred_fallthru
          _
      $region36: #{tpu_custom_call.1} parent=5 // pred_fallthru
        _
      %p2120 = scmp.le.s32.totalorder 2, %s16
      // Predicated region
      $region45: #{tpu_custom_call.1} parent=5 // pred_check
        %p2121 = pneg %p2120
      $region46: #{tpu_custom_call.1} parent=5 // pred_check_branch
        %2123 = sbr.rel (%p2121) target = $region48
      $region47: #{tpu_custom_call.1} parent=5 // pred_region
        %s2124 = ssub.s32 %s16, 2
        // Predicated region
        $region49: #{tpu_custom_call.1} parent=47 // pred_check
          %p2125 = pneg %p134
        $region50: #{tpu_custom_call.1} parent=47 // pred_check_branch
          %2127 = sbr.rel (%p2125) target = $region52
        $region51: #{tpu_custom_call.1} parent=47 // pred_region
          %s2128 = sand.u32 %s119, 1
          %s2129 = scalar_lea.sflag [#allocation6], %s2128
          %s2130 = sand.u32 %s119, 1
          %s2131 = scalar_lea.vmem [#allocation7], %s2130
          %2132 = dma.done %s2129, 16
        $region52: #{tpu_custom_call.1} parent=47 // pred_fallthru
          _
      $region48: #{tpu_custom_call.1} parent=5 // pred_fallthru
        _
    $region6: #{tpu_custom_call.1} parent=1 // loop_footer
      %s20 = sadd.s32 1, %s16
    $region7: #{tpu_custom_call.1} parent=1 // loop_footer_branch
      %15 = sbr.rel target = $region3
    $region8: #{tpu_custom_call.1} parent=1 // loop_exit
      _
    %2133 = vsyncpa [#allocation5], 1
    %s2134 = scalar_lea.sflag [#allocation5], 1
    %2135 = vsyncpa %s2134, 1
    %2136 = vsyncpa [#allocation6], 1
    %s2137 = scalar_lea.sflag [#allocation6], 1
    %2138 = vsyncpa %s2137, 1

</llo_original>
